<compile_context>
chip_gen: v7x
topology: tpu7x:2x2x1
jax: 0.10.0
libtpu: 0.0.40
codegen_flags: <defaults>
</compile_context>

<pallas_src>
import functools

import jax
import jax.numpy as jnp
import numpy as np
from jax import lax
from jax.experimental import pallas as pl
from jax.experimental.pallas import tpu as pltpu

EPS = 1e-5


# --------------------------- host-side weight transforms ---------------------


def _band_weight(w_hwio, width):
    """(3,3,Cin,Cout) HWIO -> (3, W*Cin, W*Cout) per-kernel-row Toeplitz band."""
    kh, kw, ci, co = w_hwio.shape
    band = np.zeros((kh, width * ci, width * co), np.float32)
    for dy in range(kh):
        for xo in range(width):
            for dx in range(kw):
                xi = xo + dx - 1                       # zero x-padding implicit
                if 0 <= xi < width:
                    band[dy, xi * ci:(xi + 1) * ci,
                         xo * co:(xo + 1) * co] = w_hwio[dy, dx]
    return band


def _block_diag(w_1x1, width):
    """(Cin,Cout) 1x1-conv weight -> (W*Cin, W*Cout) block-diagonal matrix."""
    ci, co = w_1x1.shape
    bd = np.zeros((width * ci, width * co), np.float32)
    for x in range(width):
        bd[x * ci:(x + 1) * ci, x * co:(x + 1) * co] = w_1x1
    return bd


def _group_proj(c, width):
    """(W*C, W*C) 0/1 projector: P[l,l'] = 1 iff lanes l, l' hold the same channel."""
    ch = np.arange(width * c) % c
    return (ch[:, None] == ch[None, :]).astype(np.float32)


def _tile_lane(vec, width):
    """Per-channel (C,)/(1,C) vector -> (1, W*C) lane-tiled f32 jnp array."""
    v = np.asarray(vec, np.float32).reshape(-1)
    return jnp.asarray(np.tile(v, width).reshape(1, -1))


# ----------------------------- fused kernel ----------------------------------


def _fused_kernel(n, h, w, has_skip, *refs):
    if has_skip:
        (x_ref, bn1g, bn1b, p_in, w1, b1,
         bn2g, bn2b, p_out, w2, b2,
         wsk, bnsg, bnsb, o_ref) = refs
    else:
        (x_ref, bn1g, bn1b, p_in, w1, b1,
         bn2g, bn2b, p_out, w2, b2, o_ref) = refs
        wsk = bnsg = bnsb = None

    mr = n * h
    inv_m = 1.0 / float(n * h * w)

    def batchnorm(v, g_ref, b_ref, p_ref):
        # Two-pass batch stats in f32 (biased variance).  Per-channel fold /
        # broadcast over the W lane groups is a (1,L)@(L,L) group-projector matmul.
        s = jnp.sum(v, axis=0, keepdims=True)
        mean = jnp.dot(s, p_ref[...], preferred_element_type=jnp.float32) * inv_m
        d = v - mean
        q = jnp.sum(d * d, axis=0, keepdims=True)
        var = jnp.dot(q, p_ref[...], preferred_element_type=jnp.float32) * inv_m
        return d * lax.rsqrt(var + EPS) * g_ref[...] + b_ref[...]

    def conv3x3(v, wband_ref, bias_ref):
        # 3x3 / pad=1 conv == 3 band matmuls (one per kernel row).  The dy shift
        # is a 1-row shift with a zero halo row -- no padded scratch, no im2col.
        l = v.shape[-1]
        v3 = v.reshape(n, h, l)
        z = jnp.zeros((n, 1, l), jnp.float32)
        up = jnp.concatenate([z, v3[:, :h - 1, :]], axis=1).reshape(mr, l)  # row y-1
        dn = jnp.concatenate([v3[:, 1:, :], z], axis=1).reshape(mr, l)      # row y+1
        acc = jnp.dot(up.astype(jnp.bfloat16), wband_ref[0],
                      preferred_element_type=jnp.float32)
        acc += jnp.dot(v.astype(jnp.bfloat16), wband_ref[1],
                       preferred_element_type=jnp.float32)
        acc += jnp.dot(dn.astype(jnp.bfloat16), wband_ref[2],
                       preferred_element_type=jnp.float32)
        return acc + bias_ref[...]

    x = x_ref[...]                                            # (N*H, W*Cin) f32

    # --- main branch: BN1 -> ReLU -> Conv3x3 -> BN2 -> ReLU -> Conv3x3 ---
    h1 = jnp.maximum(batchnorm(x, bn1g, bn1b, p_in), 0.0)
    c1 = conv3x3(h1, w1, b1)
    h2 = jnp.maximum(batchnorm(c1, bn2g, bn2b, p_out), 0.0)
    c2 = conv3x3(h2, w2, b2)

    # --- skip branch ---
    if has_skip:
        sk = jnp.dot(x.astype(jnp.bfloat16), wsk[...],
                     preferred_element_type=jnp.float32)      # Conv1x1 (no bias)
        ident = batchnorm(sk, bnsg, bnsb, p_out)
    else:
        ident = x                                             # cin == cout

    # --- residual add + final ReLU (lane-dense (N*H, W*Cout) store) ---
    o_ref[...] = jnp.maximum(c2 + ident, 0.0)


# ----------------------------- wrapper ---------------------------------------


def _prepare_kernel_params(params, width, cin, cout):
    kp = dict(
        bn1_g=_tile_lane(params["bn1_g"], width),
        bn1_b=_tile_lane(params["bn1_b"], width),
        p_in=jnp.asarray(_group_proj(cin, width)),
        w1=jnp.asarray(_band_weight(np.asarray(params["w1_hwio"], np.float32), width),
                       jnp.bfloat16),
        b1=_tile_lane(params["b1"], width),
        bn2_g=_tile_lane(params["bn2_g"], width),
        bn2_b=_tile_lane(params["bn2_b"], width),
        p_out=jnp.asarray(_group_proj(cout, width)),
        w2=jnp.asarray(_band_weight(np.asarray(params["w2_hwio"], np.float32), width),
                       jnp.bfloat16),
        b2=_tile_lane(params["b2"], width),
        w_skip=None,
    )
    if params["w_skip"] is not None:
        kp["w_skip"] = jnp.asarray(
            _block_diag(np.asarray(params["w_skip"], np.float32), width), jnp.bfloat16)
        kp["bns_g"] = _tile_lane(params["bns_g"], width)
        kp["bns_b"] = _tile_lane(params["bns_b"], width)
    return kp


def residual_block_forward_nhwc(x_nhwc, params, stride=1):
    if stride != 1:
        # TODO(synk): reference module is shape-inconsistent for stride != 1.
        raise NotImplementedError("stride != 1 is not supported")
    n, h, w, cin = x_nhwc.shape
    cout = int(params["b1"].shape[-1])
    has_skip = params["w_skip"] is not None
    if not has_skip:
        assert cin == cout, "identity skip requires in_channels == out_channels"

    kp = _prepare_kernel_params(params, w, cin, cout)
    mr, lin, lout = n * h, w * cin, w * cout

    x2d = x_nhwc.astype(jnp.float32).reshape(mr, lin)        # lane-folded layout
    args = [x2d, kp["bn1_g"], kp["bn1_b"], kp["p_in"], kp["w1"], kp["b1"],
            kp["bn2_g"], kp["bn2_b"], kp["p_out"], kp["w2"], kp["b2"]]
    if has_skip:
        args += [kp["w_skip"], kp["bns_g"], kp["bns_b"]]

    # Re-derived VMEM budget (v7x-safe: 64 MiB per TensorCore).
    in_bytes = sum(int(np.prod(a.shape)) * a.dtype.itemsize for a in args)
    out_bytes = mr * lout * 4
    work_bytes = 8 * mr * max(lin, lout) * 4                 # live f32 tiles
    vmem_needed = in_bytes + out_bytes + work_bytes
    if vmem_needed > 48 * 1024 * 1024:
        raise ValueError("inputs too large for whole-array VMEM residency; add an "
                         "M-tiled grid (see TODO) before scaling up")
    vmem_limit = int(min(64 * 1024 * 1024, max(4 * 1024 * 1024, 2 * vmem_needed)))

    flops = 2 * mr * (3 * lin * lout + 3 * lout * lout)
    if has_skip:
        flops += 2 * mr * lin * lout
    transcendentals = lin + 2 * lout + (lout if has_skip else 0)

    out2d = pl.pallas_call(
        functools.partial(_fused_kernel, n, h, w, has_skip),
        out_shape=jax.ShapeDtypeStruct((mr, lout), jnp.float32),
        in_specs=[pl.BlockSpec(memory_space=pltpu.MemorySpace.VMEM)] * len(args),
        out_specs=pl.BlockSpec(memory_space=pltpu.MemorySpace.VMEM),
        compiler_params=pltpu.CompilerParams(vmem_limit_bytes=vmem_limit),
        cost_estimate=pl.CostEstimate(flops=int(flops),
                                      transcendentals=int(transcendentals),
                                      bytes_accessed=int(in_bytes + out_bytes)),
    )(*args)
    return out2d.reshape(n, h, w, cout)


def residual_block_forward(x_nchw, params, stride=1):
    # NCHW public API to match the PyTorch module.
    # TODO(synk): keep activations NHWC end-to-end in a real pipeline; these two
    # transposes are full-array XLA passes outside the fused kernel.
    x = jnp.transpose(x_nchw, (0, 2, 3, 1))
    out = residual_block_forward_nhwc(x, params, stride=stride)
    return jnp.transpose(out, (0, 3, 1, 2))


# ----------------------------- params & reference ----------------------------


def init_params(key, cin, cout):
    ks = jax.random.split(key, 12)
    params = dict(
        w1_hwio=jax.random.normal(ks[0], (3, 3, cin, cout), jnp.float32) * 0.1,
        b1=jax.random.normal(ks[1], (1, cout), jnp.float32) * 0.1,
        w2_hwio=jax.random.normal(ks[2], (3, 3, cout, cout), jnp.float32) * 0.1,
        b2=jax.random.normal(ks[3], (1, cout), jnp.float32) * 0.1,
        bn1_g=1.0 + 0.1 * jax.random.normal(ks[4], (1, cin), jnp.float32),
        bn1_b=0.1 * jax.random.normal(ks[5], (1, cin), jnp.float32),
        bn2_g=1.0 + 0.1 * jax.random.normal(ks[6], (1, cout), jnp.float32),
        bn2_b=0.1 * jax.random.normal(ks[7], (1, cout), jnp.float32),
        w_skip=None,
    )
    if cin != cout:   # stride=1 but channel change -> skip = Conv1x1(no bias) + BN
        params["w_skip"] = jax.random.normal(ks[8], (cin, cout), jnp.float32) * 0.1
        params["bns_g"] = 1.0 + 0.1 * jax.random.normal(ks[9], (1, cout), jnp.float32)
        params["bns_b"] = 0.1 * jax.random.normal(ks[10], (1, cout), jnp.float32)
    return params


def ref_forward(x_nchw, params):
    # pure-JAX reference (XLA conv / reductions), mirrors the PyTorch module
    x = jnp.transpose(x_nchw, (0, 2, 3, 1)).astype(jnp.float32)

    def bn(v, g, b):
        mean = v.mean(axis=(0, 1, 2), keepdims=True)
        var = ((v - mean) ** 2).mean(axis=(0, 1, 2), keepdims=True)
        return (v - mean) * lax.rsqrt(var + EPS) * g.reshape(1, 1, 1, -1) \
            + b.reshape(1, 1, 1, -1)

    def conv(v, wgt, b=None):
        y = lax.conv_general_dilated(
            v, wgt, (1, 1), "SAME", dimension_numbers=("NHWC", "HWIO", "NHWC"))
        return y if b is None else y + b.reshape(1, 1, 1, -1)

    h = jax.nn.relu(bn(x, params["bn1_g"], params["bn1_b"]))
    h = conv(h, params["w1_hwio"], params["b1"])
    h = jax.nn.relu(bn(h, params["bn2_g"], params["bn2_b"]))
    h = conv(h, params["w2_hwio"], params["b2"])
    if params["w_skip"] is not None:
        ident = conv(x, params["w_skip"].reshape(1, 1, *params["w_skip"].shape))
        ident = bn(ident, params["bns_g"], params["bns_b"])
    else:
        ident = x
    out = jax.nn.relu(h + ident)
    return jnp.transpose(out, (0, 3, 1, 2))


if __name__ == "__main__":
    key = jax.random.PRNGKey(0)
    kx, kp, kx2, kp2 = jax.random.split(key, 4)

    # Case 1: in_channels != out_channels -> Conv1x1(no bias) + BN skip branch.
    N, CIN, COUT, H, W = 2, 4, 8, 16, 16
    x = jax.random.normal(kx, (N, CIN, H, W), jnp.float32)
    params = init_params(kp, CIN, COUT)
    out = jax.block_until_ready(residual_block_forward(x, params))
    assert out.shape == (N, COUT, H, W)
    np.testing.assert_allclose(np.asarray(out), np.asarray(ref_forward(x, params)),
                               rtol=2e-2, atol=2e-2)   # bf16 MXU operands

    # Case 2: in_channels == out_channels -> identity skip.
    x2 = jax.random.normal(kx2, (N, COUT, H, W), jnp.float32)
    params2 = init_params(kp2, COUT, COUT)
    out2 = jax.block_until_ready(residual_block_forward(x2, params2))
    assert out2.shape == (N, COUT, H, W)
    np.testing.assert_allclose(np.asarray(out2), np.asarray(ref_forward(x2, params2)),
                               rtol=2e-2, atol=2e-2)

    print("KERNEL_OK")
</pallas_src>

<mosaic_0001>
module attributes {stable_mosaic.version = 11 : i64} {
  func.func @_fused_kernel(%arg0: memref<32x64xf32, #tpu.memory_space<vmem>>, %arg1: memref<1x64xf32, #tpu.memory_space<vmem>>, %arg2: memref<1x64xf32, #tpu.memory_space<vmem>>, %arg3: memref<64x64xf32, #tpu.memory_space<vmem>>, %arg4: memref<3x64x128xbf16, #tpu.memory_space<vmem>>, %arg5: memref<1x128xf32, #tpu.memory_space<vmem>>, %arg6: memref<1x128xf32, #tpu.memory_space<vmem>>, %arg7: memref<1x128xf32, #tpu.memory_space<vmem>>, %arg8: memref<128x128xf32, #tpu.memory_space<vmem>>, %arg9: memref<3x128x128xbf16, #tpu.memory_space<vmem>>, %arg10: memref<1x128xf32, #tpu.memory_space<vmem>>, %arg11: memref<64x128xbf16, #tpu.memory_space<vmem>>, %arg12: memref<1x128xf32, #tpu.memory_space<vmem>>, %arg13: memref<1x128xf32, #tpu.memory_space<vmem>>, %arg14: memref<32x128xf32, #tpu.memory_space<vmem>>) attributes {dimension_semantics = [], scalar_prefetch = 0 : i64, scratch_operands = 0 : i64, tpu.core_type = #tpu.core_type<tc>} {
    %c0 = arith.constant 0 : index
    %c0_0 = arith.constant 0 : index
    %0 = vector.load %arg0[%c0, %c0_0] : memref<32x64xf32, #tpu.memory_space<vmem>>, vector<32x64xf32>
    %cst = arith.constant dense<0.000000e+00> : vector<64xf32>
    %1 = vector.multi_reduction <add>, %0, %cst [0] : vector<32x64xf32> to vector<64xf32>
    %2 = vector.shape_cast %1 : vector<64xf32> to vector<1x64xf32>
    %c0_1 = arith.constant 0 : index
    %c0_2 = arith.constant 0 : index
    %3 = vector.load %arg3[%c0_1, %c0_2] : memref<64x64xf32, #tpu.memory_space<vmem>>, vector<64x64xf32>
    %cst_3 = arith.constant dense<0.000000e+00> : vector<1x64xf32>
    %4 = tpu.matmul %2, %3, %cst_3 {dimension_numbers = #tpu.dot_dimension_numbers<[1], [0], [0], [1], [0, 0, 1, 1], [], []>} : vector<1x64xf32>, vector<64x64xf32>, vector<1x64xf32> -> vector<1x64xf32>
    %cst_4 = arith.constant 0.001953125 : f32
    %5 = vector.broadcast %cst_4 : f32 to vector<1x64xf32>
    %6 = arith.mulf %4, %5 : vector<1x64xf32>
    %7 = vector.broadcast %6 : vector<1x64xf32> to vector<32x64xf32>
    %8 = arith.subf %0, %7 : vector<32x64xf32>
    %9 = arith.mulf %8, %8 : vector<32x64xf32>
    %cst_5 = arith.constant dense<0.000000e+00> : vector<64xf32>
    %10 = vector.multi_reduction <add>, %9, %cst_5 [0] : vector<32x64xf32> to vector<64xf32>
    %11 = vector.shape_cast %10 : vector<64xf32> to vector<1x64xf32>
    %c0_6 = arith.constant 0 : index
    %c0_7 = arith.constant 0 : index
    %12 = vector.load %arg3[%c0_6, %c0_7] : memref<64x64xf32, #tpu.memory_space<vmem>>, vector<64x64xf32>
    %cst_8 = arith.constant dense<0.000000e+00> : vector<1x64xf32>
    %13 = tpu.matmul %11, %12, %cst_8 {dimension_numbers = #tpu.dot_dimension_numbers<[1], [0], [0], [1], [0, 0, 1, 1], [], []>} : vector<1x64xf32>, vector<64x64xf32>, vector<1x64xf32> -> vector<1x64xf32>
    %cst_9 = arith.constant 0.001953125 : f32
    %14 = vector.broadcast %cst_9 : f32 to vector<1x64xf32>
    %15 = arith.mulf %13, %14 : vector<1x64xf32>
    %cst_10 = arith.constant 9.99999974E-6 : f32
    %16 = vector.broadcast %cst_10 : f32 to vector<1x64xf32>
    %17 = arith.addf %15, %16 : vector<1x64xf32>
    %18 = math.rsqrt %17 : vector<1x64xf32>
    %19 = vector.broadcast %18 : vector<1x64xf32> to vector<32x64xf32>
    %20 = arith.mulf %8, %19 : vector<32x64xf32>
    %c0_11 = arith.constant 0 : index
    %c0_12 = arith.constant 0 : index
    %21 = vector.load %arg1[%c0_11, %c0_12] : memref<1x64xf32, #tpu.memory_space<vmem>>, vector<1x64xf32>
    %22 = vector.broadcast %21 : vector<1x64xf32> to vector<32x64xf32>
    %23 = arith.mulf %20, %22 : vector<32x64xf32>
    %c0_13 = arith.constant 0 : index
    %c0_14 = arith.constant 0 : index
    %24 = vector.load %arg2[%c0_13, %c0_14] : memref<1x64xf32, #tpu.memory_space<vmem>>, vector<1x64xf32>
    %25 = vector.broadcast %24 : vector<1x64xf32> to vector<32x64xf32>
    %26 = arith.addf %23, %25 : vector<32x64xf32>
    %cst_15 = arith.constant 0.000000e+00 : f32
    %27 = vector.broadcast %cst_15 : f32 to vector<32x64xf32>
    %28 = arith.maximumf %26, %27 : vector<32x64xf32>
    %29 = vector.shape_cast %28 : vector<32x64xf32> to vector<2x16x64xf32>
    %cst_16 = arith.constant 0.000000e+00 : f32
    %30 = vector.broadcast %cst_16 : f32 to vector<2x1x64xf32>
    %31 = vector.extract_strided_slice %29 {offsets = [0, 0, 0], sizes = [2, 15, 64], strides = [1, 1, 1]} : vector<2x16x64xf32> to vector<2x15x64xf32>
    %32 = tpu.concatenate %30, %31 in 1 : vector<2x1x64xf32>, vector<2x15x64xf32> -> vector<2x16x64xf32>
    %33 = vector.shape_cast %32 : vector<2x16x64xf32> to vector<32x64xf32>
    %34 = vector.extract_strided_slice %29 {offsets = [0, 1, 0], sizes = [2, 15, 64], strides = [1, 1, 1]} : vector<2x16x64xf32> to vector<2x15x64xf32>
    %35 = tpu.concatenate %34, %30 in 1 : vector<2x15x64xf32>, vector<2x1x64xf32> -> vector<2x16x64xf32>
    %36 = vector.shape_cast %35 : vector<2x16x64xf32> to vector<32x64xf32>
    %37 = arith.truncf %33 : vector<32x64xf32> to vector<32x64xbf16>
    %c0_17 = arith.constant 0 : index
    %c0_18 = arith.constant 0 : index
    %c0_19 = arith.constant 0 : index
    %38 = vector.load %arg4[%c0_17, %c0_18, %c0_19] : memref<3x64x128xbf16, #tpu.memory_space<vmem>>, vector<1x64x128xbf16>
    %39 = vector.shape_cast %38 : vector<1x64x128xbf16> to vector<64x128xbf16>
    %cst_20 = arith.constant dense<0.000000e+00> : vector<32x128xf32>
    %40 = tpu.matmul %37, %39, %cst_20 {dimension_numbers = #tpu.dot_dimension_numbers<[1], [0], [0], [1], [0, 0, 1, 1], [], []>} : vector<32x64xbf16>, vector<64x128xbf16>, vector<32x128xf32> -> vector<32x128xf32>
    %41 = arith.truncf %28 : vector<32x64xf32> to vector<32x64xbf16>
    %c1 = arith.constant 1 : index
    %c0_21 = arith.constant 0 : index
    %c0_22 = arith.constant 0 : index
    %42 = vector.load %arg4[%c1, %c0_21, %c0_22] : memref<3x64x128xbf16, #tpu.memory_space<vmem>>, vector<1x64x128xbf16>
    %43 = vector.shape_cast %42 : vector<1x64x128xbf16> to vector<64x128xbf16>
    %cst_23 = arith.constant dense<0.000000e+00> : vector<32x128xf32>
    %44 = tpu.matmul %41, %43, %cst_23 {dimension_numbers = #tpu.dot_dimension_numbers<[1], [0], [0], [1], [0, 0, 1, 1], [], []>} : vector<32x64xbf16>, vector<64x128xbf16>, vector<32x128xf32> -> vector<32x128xf32>
    %45 = arith.addf %40, %44 : vector<32x128xf32>
    %46 = arith.truncf %36 : vector<32x64xf32> to vector<32x64xbf16>
    %c2 = arith.constant 2 : index
    %c0_24 = arith.constant 0 : index
    %c0_25 = arith.constant 0 : index
    %47 = vector.load %arg4[%c2, %c0_24, %c0_25] : memref<3x64x128xbf16, #tpu.memory_space<vmem>>, vector<1x64x128xbf16>
    %48 = vector.shape_cast %47 : vector<1x64x128xbf16> to vector<64x128xbf16>
    %cst_26 = arith.constant dense<0.000000e+00> : vector<32x128xf32>
    %49 = tpu.matmul %46, %48, %cst_26 {dimension_numbers = #tpu.dot_dimension_numbers<[1], [0], [0], [1], [0, 0, 1, 1], [], []>} : vector<32x64xbf16>, vector<64x128xbf16>, vector<32x128xf32> -> vector<32x128xf32>
    %50 = arith.addf %45, %49 : vector<32x128xf32>
    %c0_27 = arith.constant 0 : index
    %c0_28 = arith.constant 0 : index
    %51 = vector.load %arg5[%c0_27, %c0_28] : memref<1x128xf32, #tpu.memory_space<vmem>>, vector<1x128xf32>
    %52 = vector.broadcast %51 : vector<1x128xf32> to vector<32x128xf32>
    %53 = arith.addf %50, %52 : vector<32x128xf32>
    %cst_29 = arith.constant dense<0.000000e+00> : vector<128xf32>
    %54 = vector.multi_reduction <add>, %53, %cst_29 [0] : vector<32x128xf32> to vector<128xf32>
    %55 = vector.shape_cast %54 : vector<128xf32> to vector<1x128xf32>
    %c0_30 = arith.constant 0 : index
    %c0_31 = arith.constant 0 : index
    %56 = vector.load %arg8[%c0_30, %c0_31] : memref<128x128xf32, #tpu.memory_space<vmem>>, vector<128x128xf32>
    %cst_32 = arith.constant dense<0.000000e+00> : vector<1x128xf32>
    %57 = tpu.matmul %55, %56, %cst_32 {dimension_numbers = #tpu.dot_dimension_numbers<[1], [0], [0], [1], [0, 0, 1, 1], [], []>} : vector<1x128xf32>, vector<128x128xf32>, vector<1x128xf32> -> vector<1x128xf32>
    %cst_33 = arith.constant 0.001953125 : f32
    %58 = vector.broadcast %cst_33 : f32 to vector<1x128xf32>
    %59 = arith.mulf %57, %58 : vector<1x128xf32>
    %60 = vector.broadcast %59 : vector<1x128xf32> to vector<32x128xf32>
    %61 = arith.subf %53, %60 : vector<32x128xf32>
    %62 = arith.mulf %61, %61 : vector<32x128xf32>
    %cst_34 = arith.constant dense<0.000000e+00> : vector<128xf32>
    %63 = vector.multi_reduction <add>, %62, %cst_34 [0] : vector<32x128xf32> to vector<128xf32>
    %64 = vector.shape_cast %63 : vector<128xf32> to vector<1x128xf32>
    %c0_35 = arith.constant 0 : index
    %c0_36 = arith.constant 0 : index
    %65 = vector.load %arg8[%c0_35, %c0_36] : memref<128x128xf32, #tpu.memory_space<vmem>>, vector<128x128xf32>
    %cst_37 = arith.constant dense<0.000000e+00> : vector<1x128xf32>
    %66 = tpu.matmul %64, %65, %cst_37 {dimension_numbers = #tpu.dot_dimension_numbers<[1], [0], [0], [1], [0, 0, 1, 1], [], []>} : vector<1x128xf32>, vector<128x128xf32>, vector<1x128xf32> -> vector<1x128xf32>
    %cst_38 = arith.constant 0.001953125 : f32
    %67 = vector.broadcast %cst_38 : f32 to vector<1x128xf32>
    %68 = arith.mulf %66, %67 : vector<1x128xf32>
    %cst_39 = arith.constant 9.99999974E-6 : f32
    %69 = vector.broadcast %cst_39 : f32 to vector<1x128xf32>
    %70 = arith.addf %68, %69 : vector<1x128xf32>
    %71 = math.rsqrt %70 : vector<1x128xf32>
    %72 = vector.broadcast %71 : vector<1x128xf32> to vector<32x128xf32>
    %73 = arith.mulf %61, %72 : vector<32x128xf32>
    %c0_40 = arith.constant 0 : index
    %c0_41 = arith.constant 0 : index
    %74 = vector.load %arg6[%c0_40, %c0_41] : memref<1x128xf32, #tpu.memory_space<vmem>>, vector<1x128xf32>
    %75 = vector.broadcast %74 : vector<1x128xf32> to vector<32x128xf32>
    %76 = arith.mulf %73, %75 : vector<32x128xf32>
    %c0_42 = arith.constant 0 : index
    %c0_43 = arith.constant 0 : index
    %77 = vector.load %arg7[%c0_42, %c0_43] : memref<1x128xf32, #tpu.memory_space<vmem>>, vector<1x128xf32>
    %78 = vector.broadcast %77 : vector<1x128xf32> to vector<32x128xf32>
    %79 = arith.addf %76, %78 : vector<32x128xf32>
    %cst_44 = arith.constant 0.000000e+00 : f32
    %80 = vector.broadcast %cst_44 : f32 to vector<32x128xf32>
    %81 = arith.maximumf %79, %80 : vector<32x128xf32>
    %82 = vector.shape_cast %81 : vector<32x128xf32> to vector<2x16x128xf32>
    %cst_45 = arith.constant 0.000000e+00 : f32
    %83 = vector.broadcast %cst_45 : f32 to vector<2x1x128xf32>
    %84 = vector.extract_strided_slice %82 {offsets = [0, 0, 0], sizes = [2, 15, 128], strides = [1, 1, 1]} : vector<2x16x128xf32> to vector<2x15x128xf32>
    %85 = tpu.concatenate %83, %84 in 1 : vector<2x1x128xf32>, vector<2x15x128xf32> -> vector<2x16x128xf32>
    %86 = vector.shape_cast %85 : vector<2x16x128xf32> to vector<32x128xf32>
    %87 = vector.extract_strided_slice %82 {offsets = [0, 1, 0], sizes = [2, 15, 128], strides = [1, 1, 1]} : vector<2x16x128xf32> to vector<2x15x128xf32>
    %88 = tpu.concatenate %87, %83 in 1 : vector<2x15x128xf32>, vector<2x1x128xf32> -> vector<2x16x128xf32>
    %89 = vector.shape_cast %88 : vector<2x16x128xf32> to vector<32x128xf32>
    %90 = arith.truncf %86 : vector<32x128xf32> to vector<32x128xbf16>
    %c0_46 = arith.constant 0 : index
    %c0_47 = arith.constant 0 : index
    %c0_48 = arith.constant 0 : index
    %91 = vector.load %arg9[%c0_46, %c0_47, %c0_48] : memref<3x128x128xbf16, #tpu.memory_space<vmem>>, vector<1x128x128xbf16>
    %92 = vector.shape_cast %91 : vector<1x128x128xbf16> to vector<128x128xbf16>
    %cst_49 = arith.constant dense<0.000000e+00> : vector<32x128xf32>
    %93 = tpu.matmul %90, %92, %cst_49 {dimension_numbers = #tpu.dot_dimension_numbers<[1], [0], [0], [1], [0, 0, 1, 1], [], []>} : vector<32x128xbf16>, vector<128x128xbf16>, vector<32x128xf32> -> vector<32x128xf32>
    %94 = arith.truncf %81 : vector<32x128xf32> to vector<32x128xbf16>
    %c1_50 = arith.constant 1 : index
    %c0_51 = arith.constant 0 : index
    %c0_52 = arith.constant 0 : index
    %95 = vector.load %arg9[%c1_50, %c0_51, %c0_52] : memref<3x128x128xbf16, #tpu.memory_space<vmem>>, vector<1x128x128xbf16>
    %96 = vector.shape_cast %95 : vector<1x128x128xbf16> to vector<128x128xbf16>
    %cst_53 = arith.constant dense<0.000000e+00> : vector<32x128xf32>
    %97 = tpu.matmul %94, %96, %cst_53 {dimension_numbers = #tpu.dot_dimension_numbers<[1], [0], [0], [1], [0, 0, 1, 1], [], []>} : vector<32x128xbf16>, vector<128x128xbf16>, vector<32x128xf32> -> vector<32x128xf32>
    %98 = arith.addf %93, %97 : vector<32x128xf32>
    %99 = arith.truncf %89 : vector<32x128xf32> to vector<32x128xbf16>
    %c2_54 = arith.constant 2 : index
    %c0_55 = arith.constant 0 : index
    %c0_56 = arith.constant 0 : index
    %100 = vector.load %arg9[%c2_54, %c0_55, %c0_56] : memref<3x128x128xbf16, #tpu.memory_space<vmem>>, vector<1x128x128xbf16>
    %101 = vector.shape_cast %100 : vector<1x128x128xbf16> to vector<128x128xbf16>
    %cst_57 = arith.constant dense<0.000000e+00> : vector<32x128xf32>
    %102 = tpu.matmul %99, %101, %cst_57 {dimension_numbers = #tpu.dot_dimension_numbers<[1], [0], [0], [1], [0, 0, 1, 1], [], []>} : vector<32x128xbf16>, vector<128x128xbf16>, vector<32x128xf32> -> vector<32x128xf32>
    %103 = arith.addf %98, %102 : vector<32x128xf32>
    %c0_58 = arith.constant 0 : index
    %c0_59 = arith.constant 0 : index
    %104 = vector.load %arg10[%c0_58, %c0_59] : memref<1x128xf32, #tpu.memory_space<vmem>>, vector<1x128xf32>
    %105 = vector.broadcast %104 : vector<1x128xf32> to vector<32x128xf32>
    %106 = arith.addf %103, %105 : vector<32x128xf32>
    %107 = arith.truncf %0 : vector<32x64xf32> to vector<32x64xbf16>
    %c0_60 = arith.constant 0 : index
    %c0_61 = arith.constant 0 : index
    %108 = vector.load %arg11[%c0_60, %c0_61] : memref<64x128xbf16, #tpu.memory_space<vmem>>, vector<64x128xbf16>
    %cst_62 = arith.constant dense<0.000000e+00> : vector<32x128xf32>
    %109 = tpu.matmul %107, %108, %cst_62 {dimension_numbers = #tpu.dot_dimension_numbers<[1], [0], [0], [1], [0, 0, 1, 1], [], []>} : vector<32x64xbf16>, vector<64x128xbf16>, vector<32x128xf32> -> vector<32x128xf32>
    %cst_63 = arith.constant dense<0.000000e+00> : vector<128xf32>
    %110 = vector.multi_reduction <add>, %109, %cst_63 [0] : vector<32x128xf32> to vector<128xf32>
    %111 = vector.shape_cast %110 : vector<128xf32> to vector<1x128xf32>
    %c0_64 = arith.constant 0 : index
    %c0_65 = arith.constant 0 : index
    %112 = vector.load %arg8[%c0_64, %c0_65] : memref<128x128xf32, #tpu.memory_space<vmem>>, vector<128x128xf32>
    %cst_66 = arith.constant dense<0.000000e+00> : vector<1x128xf32>
    %113 = tpu.matmul %111, %112, %cst_66 {dimension_numbers = #tpu.dot_dimension_numbers<[1], [0], [0], [1], [0, 0, 1, 1], [], []>} : vector<1x128xf32>, vector<128x128xf32>, vector<1x128xf32> -> vector<1x128xf32>
    %cst_67 = arith.constant 0.001953125 : f32
    %114 = vector.broadcast %cst_67 : f32 to vector<1x128xf32>
    %115 = arith.mulf %113, %114 : vector<1x128xf32>
    %116 = vector.broadcast %115 : vector<1x128xf32> to vector<32x128xf32>
    %117 = arith.subf %109, %116 : vector<32x128xf32>
    %118 = arith.mulf %117, %117 : vector<32x128xf32>
    %cst_68 = arith.constant dense<0.000000e+00> : vector<128xf32>
    %119 = vector.multi_reduction <add>, %118, %cst_68 [0] : vector<32x128xf32> to vector<128xf32>
    %120 = vector.shape_cast %119 : vector<128xf32> to vector<1x128xf32>
    %c0_69 = arith.constant 0 : index
    %c0_70 = arith.constant 0 : index
    %121 = vector.load %arg8[%c0_69, %c0_70] : memref<128x128xf32, #tpu.memory_space<vmem>>, vector<128x128xf32>
    %cst_71 = arith.constant dense<0.000000e+00> : vector<1x128xf32>
    %122 = tpu.matmul %120, %121, %cst_71 {dimension_numbers = #tpu.dot_dimension_numbers<[1], [0], [0], [1], [0, 0, 1, 1], [], []>} : vector<1x128xf32>, vector<128x128xf32>, vector<1x128xf32> -> vector<1x128xf32>
    %cst_72 = arith.constant 0.001953125 : f32
    %123 = vector.broadcast %cst_72 : f32 to vector<1x128xf32>
    %124 = arith.mulf %122, %123 : vector<1x128xf32>
    %cst_73 = arith.constant 9.99999974E-6 : f32
    %125 = vector.broadcast %cst_73 : f32 to vector<1x128xf32>
    %126 = arith.addf %124, %125 : vector<1x128xf32>
    %127 = math.rsqrt %126 : vector<1x128xf32>
    %128 = vector.broadcast %127 : vector<1x128xf32> to vector<32x128xf32>
    %129 = arith.mulf %117, %128 : vector<32x128xf32>
    %c0_74 = arith.constant 0 : index
    %c0_75 = arith.constant 0 : index
    %130 = vector.load %arg12[%c0_74, %c0_75] : memref<1x128xf32, #tpu.memory_space<vmem>>, vector<1x128xf32>
    %131 = vector.broadcast %130 : vector<1x128xf32> to vector<32x128xf32>
    %132 = arith.mulf %129, %131 : vector<32x128xf32>
    %c0_76 = arith.constant 0 : index
    %c0_77 = arith.constant 0 : index
    %133 = vector.load %arg13[%c0_76, %c0_77] : memref<1x128xf32, #tpu.memory_space<vmem>>, vector<1x128xf32>
    %134 = vector.broadcast %133 : vector<1x128xf32> to vector<32x128xf32>
    %135 = arith.addf %132, %134 : vector<32x128xf32>
    %136 = arith.addf %106, %135 : vector<32x128xf32>
    %cst_78 = arith.constant 0.000000e+00 : f32
    %137 = vector.broadcast %cst_78 : f32 to vector<32x128xf32>
    %138 = arith.maximumf %136, %137 : vector<32x128xf32>
    %c0_79 = arith.constant 0 : index
    %c0_80 = arith.constant 0 : index
    %139 = vector.load %arg14[%c0_79, %c0_80] : memref<32x128xf32, #tpu.memory_space<vmem>>, vector<32x128xf32>
    tpu.vector_store %arg14[%c0_79, %c0_80], %138 {strides = array<i32>} : memref<32x128xf32, #tpu.memory_space<vmem>>, vector<32x128xf32>,
    return
  }
}

</mosaic_0001>

<llo_original>
// kernel: tpu_custom_call.1
$region0: #{tpu_custom_call.1}
  #allocation0 [shape = 'u32[]', space=smem, size = 0x4, offset = 0x4, fixed_abs, tag = 'smem constant byte address 0x4 - core index']
  #allocation1 [shape = 'u32[144,128]{1,0:T(1,128)}', space=vmem, size = 0x12000, scoped, tag = 'internal scratch']
  %s0 = inlined_call_operand.hbm [shape: f32[32,64], index: 0, kind: input, shape index: {}]
  %s1 = inlined_call_operand.vmem [shape: f32[1,64], index: 1, kind: input, shape index: {}]
  %s2 = inlined_call_operand.vmem [shape: f32[1,64], index: 2, kind: input, shape index: {}]
  %s3 = inlined_call_operand.hbm [shape: f32[64,64], index: 3, kind: input, shape index: {}]
  %s4 = inlined_call_operand.hbm [shape: bf16[3,64,128], index: 4, kind: input, shape index: {}]
  %s5 = inlined_call_operand.vmem [shape: f32[1,128], index: 5, kind: input, shape index: {}]
  %s6 = inlined_call_operand.vmem [shape: f32[1,128], index: 6, kind: input, shape index: {}]
  %s7 = inlined_call_operand.vmem [shape: f32[1,128], index: 7, kind: input, shape index: {}]
  %s8 = inlined_call_operand.hbm [shape: f32[128,128], index: 8, kind: input, shape index: {}]
  %s9 = inlined_call_operand.hbm [shape: bf16[3,128,128], index: 9, kind: input, shape index: {}]
  %s10 = inlined_call_operand.vmem [shape: f32[1,128], index: 10, kind: input, shape index: {}]
  %s11 = inlined_call_operand.vmem [shape: bf16[64,128], index: 11, kind: input, shape index: {}]
  %s12 = inlined_call_operand.vmem [shape: f32[1,128], index: 12, kind: input, shape index: {}]
  %s13 = inlined_call_operand.vmem [shape: f32[1,128], index: 13, kind: input, shape index: {}]
  %s14 = inlined_call_operand.hbm [shape: f32[32,128], index: 14, kind: output, shape index: {}]
  %s15 = sld [smem:[#allocation0]]
  $region86: #{tpu_custom_call.1} parent=0
    _
  %s17 = ssub.s32 1, %s15
  %s18 = scalar_select 0, %s17, %s15
  $region1: #{tpu_custom_call.1} parent=0
    #allocation2 [shape = 'u8[16384]{0}', space=vmem, size = 0x4000, scoped, tag = 'input window, operand 0, single buffered']
    #allocation3 [shape = 's32[1]{0}', space=sflag, size = 0x4, scoped, tag = 'scoped memory for tpu_custom_call.1']
    #allocation4 [shape = 's32[1]{0}', space=sflag, size = 0x4, scoped, tag = 'scoped memory for tpu_custom_call.1']
    #allocation5 [shape = 'u8[32768]{0}', space=vmem, size = 0x8000, scoped, tag = 'input window, operand 3, single buffered']
    #allocation6 [shape = 's32[1]{0}', space=sflag, size = 0x4, scoped, tag = 'scoped memory for tpu_custom_call.1']
    #allocation7 [shape = 'u8[49152]{0}', space=vmem, size = 0xc000, scoped, tag = 'input window, operand 4, single buffered']
    #allocation8 [shape = 'u8[65536]{0}', space=vmem, size = 0x10000, scoped, tag = 'input window, operand 8, single buffered']
    #allocation9 [shape = 's32[1]{0}', space=sflag, size = 0x4, scoped, tag = 'scoped memory for tpu_custom_call.1']
    #allocation10 [shape = 'u8[98304]{0}', space=vmem, size = 0x18000, scoped, tag = 'input window, operand 9, single buffered']
    #allocation11 [shape = 'u8[16384]{0}', space=vmem, size = 0x4000, scoped, tag = 'output window, operand 0, single buffered']
    %19 = vsyncpa [#allocation3], 0
    %20 = vsyncpa [#allocation6], 0
    %21 = vsyncpa [#allocation9], 0
    %22 = vsyncpa [#allocation4], 0
    // Predicated region
    $region2: #{tpu_custom_call.1} parent=1 // pred_check
      _
    $region3: #{tpu_custom_call.1} parent=1 // pred_check_branch
      %24 = sbr.rel (0) target = $region5
    $region4: #{tpu_custom_call.1} parent=1 // pred_region
      %s26 = ssub.s32 512, 512
      %27 = vsyncadd [#allocation3], %s26
      %s28 = sshll.u32 [#allocation2], 4
      %s29 = int_to_ptr.vmem [resolvable:$true] %s28
      %34 = dma.hbm_to_vmem [thread:$0]  %s0, 512, %s29, [#allocation3], 128, 128, 8
    $region5: #{tpu_custom_call.1} parent=1 // pred_fallthru
      _
    // Predicated region
    $region6: #{tpu_custom_call.1} parent=1 // pred_check
      _
    $region7: #{tpu_custom_call.1} parent=1 // pred_check_branch
      %36 = sbr.rel (0) target = $region9
    $region8: #{tpu_custom_call.1} parent=1 // pred_region
      _
    $region9: #{tpu_custom_call.1} parent=1 // pred_fallthru
      _
    // Predicated region
    $region10: #{tpu_custom_call.1} parent=1 // pred_check
      _
    $region11: #{tpu_custom_call.1} parent=1 // pred_check_branch
      %38 = sbr.rel (0) target = $region13
    $region12: #{tpu_custom_call.1} parent=1 // pred_region
      _
    $region13: #{tpu_custom_call.1} parent=1 // pred_fallthru
      _
    // Predicated region
    $region14: #{tpu_custom_call.1} parent=1 // pred_check
      _
    $region15: #{tpu_custom_call.1} parent=1 // pred_check_branch
      %40 = sbr.rel (0) target = $region17
    $region16: #{tpu_custom_call.1} parent=1 // pred_region
      %s42 = ssub.s32 1024, 1024
      %43 = vsyncadd [#allocation6], %s42
      %s44 = sshll.u32 [#allocation5], 4
      %s45 = int_to_ptr.vmem [resolvable:$true] %s44
      %50 = dma.hbm_to_vmem [thread:$0]  %s3, 1024, %s45, [#allocation6], 128, 128, 8
    $region17: #{tpu_custom_call.1} parent=1 // pred_fallthru
      _
    // Predicated region
    $region18: #{tpu_custom_call.1} parent=1 // pred_check
      _
    $region19: #{tpu_custom_call.1} parent=1 // pred_check_branch
      %52 = sbr.rel (0) target = $region21
    $region20: #{tpu_custom_call.1} parent=1 // pred_region
      %s54 = ssub.s32 1536, 1536
      %55 = vsyncadd [#allocation6], %s54
      %s56 = sshll.u32 [#allocation7], 4
      %s57 = int_to_ptr.vmem [resolvable:$true] %s56
      %62 = dma.hbm_to_vmem [thread:$0]  %s4, 1536, %s57, [#allocation6], 64, 64, 4
    $region21: #{tpu_custom_call.1} parent=1 // pred_fallthru
      _
    // Predicated region
    $region22: #{tpu_custom_call.1} parent=1 // pred_check
      _
    $region23: #{tpu_custom_call.1} parent=1 // pred_check_branch
      %64 = sbr.rel (0) target = $region25
    $region24: #{tpu_custom_call.1} parent=1 // pred_region
      _
    $region25: #{tpu_custom_call.1} parent=1 // pred_fallthru
      _
    // Predicated region
    $region26: #{tpu_custom_call.1} parent=1 // pred_check
      _
    $region27: #{tpu_custom_call.1} parent=1 // pred_check_branch
      %66 = sbr.rel (0) target = $region29
    $region28: #{tpu_custom_call.1} parent=1 // pred_region
      _
    $region29: #{tpu_custom_call.1} parent=1 // pred_fallthru
      _
    // Predicated region
    $region30: #{tpu_custom_call.1} parent=1 // pred_check
      _
    $region31: #{tpu_custom_call.1} parent=1 // pred_check_branch
      %68 = sbr.rel (0) target = $region33
    $region32: #{tpu_custom_call.1} parent=1 // pred_region
      _
    $region33: #{tpu_custom_call.1} parent=1 // pred_fallthru
      _
    // Predicated region
    $region34: #{tpu_custom_call.1} parent=1 // pred_check
      _
    $region35: #{tpu_custom_call.1} parent=1 // pred_check_branch
      %70 = sbr.rel (0) target = $region37
    $region36: #{tpu_custom_call.1} parent=1 // pred_region
      %s72 = ssub.s32 2048, 2048
      %73 = vsyncadd [#allocation9], %s72
      %s74 = sshll.u32 [#allocation8], 4
      %s75 = int_to_ptr.vmem [resolvable:$true] %s74
      %80 = dma.hbm_to_vmem [thread:$0]  %s8, 2048, %s75, [#allocation9], 128, 128, 8
    $region37: #{tpu_custom_call.1} parent=1 // pred_fallthru
      _
    // Predicated region
    $region38: #{tpu_custom_call.1} parent=1 // pred_check
      _
    $region39: #{tpu_custom_call.1} parent=1 // pred_check_branch
      %82 = sbr.rel (0) target = $region41
    $region40: #{tpu_custom_call.1} parent=1 // pred_region
      %s84 = ssub.s32 3072, 3072
      %85 = vsyncadd [#allocation9], %s84
      %s86 = sshll.u32 [#allocation10], 4
      %s87 = int_to_ptr.vmem [resolvable:$true] %s86
      %92 = dma.hbm_to_vmem [thread:$0]  %s9, 3072, %s87, [#allocation9], 64, 64, 4
    $region41: #{tpu_custom_call.1} parent=1 // pred_fallthru
      _
    // Predicated region
    $region42: #{tpu_custom_call.1} parent=1 // pred_check
      _
    $region43: #{tpu_custom_call.1} parent=1 // pred_check_branch
      %94 = sbr.rel (0) target = $region45
    $region44: #{tpu_custom_call.1} parent=1 // pred_region
      _
    $region45: #{tpu_custom_call.1} parent=1 // pred_fallthru
      _
    // Predicated region
    $region46: #{tpu_custom_call.1} parent=1 // pred_check
      _
    $region47: #{tpu_custom_call.1} parent=1 // pred_check_branch
      %96 = sbr.rel (0) target = $region49
    $region48: #{tpu_custom_call.1} parent=1 // pred_region
      _
    $region49: #{tpu_custom_call.1} parent=1 // pred_fallthru
      _
    // Predicated region
    $region50: #{tpu_custom_call.1} parent=1 // pred_check
      _
    $region51: #{tpu_custom_call.1} parent=1 // pred_check_branch
      %98 = sbr.rel (0) target = $region53
    $region52: #{tpu_custom_call.1} parent=1 // pred_region
      _
    $region53: #{tpu_custom_call.1} parent=1 // pred_fallthru
      _
    // Predicated region
    $region54: #{tpu_custom_call.1} parent=1 // pred_check
      _
    $region55: #{tpu_custom_call.1} parent=1 // pred_check_branch
      %100 = sbr.rel (0) target = $region57
    $region56: #{tpu_custom_call.1} parent=1 // pred_region
      _
    $region57: #{tpu_custom_call.1} parent=1 // pred_fallthru
      _
    // Predicated region
    $region58: #{tpu_custom_call.1} parent=1 // pred_check
      _
    $region59: #{tpu_custom_call.1} parent=1 // pred_check_branch
      %102 = sbr.rel (0) target = $region61
    $region60: #{tpu_custom_call.1} parent=1 // pred_region
      %103 = dma.done [#allocation3], 512
    $region61: #{tpu_custom_call.1} parent=1 // pred_fallthru
      _
    // Predicated region
    $region62: #{tpu_custom_call.1} parent=1 // pred_check
      _
    $region63: #{tpu_custom_call.1} parent=1 // pred_check_branch
      %105 = sbr.rel (0) target = $region65
    $region64: #{tpu_custom_call.1} parent=1 // pred_region
      %106 = dma.done [#allocation6], 1024
    $region65: #{tpu_custom_call.1} parent=1 // pred_fallthru
      _
    // Predicated region
    $region66: #{tpu_custom_call.1} parent=1 // pred_check
      _
    $region67: #{tpu_custom_call.1} parent=1 // pred_check_branch
      %108 = sbr.rel (0) target = $region69
    $region68: #{tpu_custom_call.1} parent=1 // pred_region
      %109 = dma.done [#allocation6], 1536
    $region69: #{tpu_custom_call.1} parent=1 // pred_fallthru
      _
    // Predicated region
    $region70: #{tpu_custom_call.1} parent=1 // pred_check
      _
    $region71: #{tpu_custom_call.1} parent=1 // pred_check_branch
      %111 = sbr.rel (0) target = $region73
    $region72: #{tpu_custom_call.1} parent=1 // pred_region
      %112 = dma.done [#allocation9], 2048
    $region73: #{tpu_custom_call.1} parent=1 // pred_fallthru
      _
    // Predicated region
    $region74: #{tpu_custom_call.1} parent=1 // pred_check
      _
    $region75: #{tpu_custom_call.1} parent=1 // pred_check_branch
      %114 = sbr.rel (0) target = $region77
    $region76: #{tpu_custom_call.1} parent=1 // pred_region
      %115 = dma.done [#allocation9], 3072
    $region77: #{tpu_custom_call.1} parent=1 // pred_fallthru
      _
    %v117 = vld [vmem:[#allocation2] sm:$0xff]
    %v118 = vld [vmem:[#allocation2 + $0x8] sm:$0xff]
    %v119 = vld [vmem:[#allocation2 + $0x10] sm:$0xff]
    %v120 = vld [vmem:[#allocation2 + $0x18] sm:$0xff]
    %vm121 = vcmask 523264
    %v122 = vsel %vm121, %v117, 0.0
    %v123 = vsel %vm121, %v118, 0.0
    %v124 = vadd.f32 %v122, %v123
    %v125 = vsel %vm121, %v119, 0.0
    %v126 = vadd.f32 %v124, %v125
    %v127 = vsel %vm121, %v120, 0.0
    %v128 = vadd.f32 %v126, %v127
    %v129 = vrot.slane %v128, 4
    %v130 = vadd.f32 %v128, %v129
    %v131 = vrot.slane %v130, 2
    %v132 = vadd.f32 %v130, %v131
    %v133 = vrot.slane %v132, 1
    %v134 = vadd.f32 %v132, %v133
    %v135 = vld [vmem:[#allocation5] sm:$0xff]
    %v136 = vld [vmem:[#allocation5 + $0x8] sm:$0xff]
    %v137 = vld [vmem:[#allocation5 + $0x10] sm:$0xff]
    %v138 = vld [vmem:[#allocation5 + $0x18] sm:$0xff]
    %v139 = vld [vmem:[#allocation5 + $0x20] sm:$0xff]
    %v140 = vld [vmem:[#allocation5 + $0x28] sm:$0xff]
    %v141 = vld [vmem:[#allocation5 + $0x30] sm:$0xff]
    %v142 = vld [vmem:[#allocation5 + $0x38] sm:$0xff]
    %v144 = vsel %vm121, %v134, 0
    %146 = vmatprep.subr.mxu0 0.0
    %147 = vmatpush1.msra.mxu0 %v135
    %148 = vmatprep.subr.mxu0 0.0
    %149 = vmatpush1.msra.mxu0 %v136
    %150 = vmatprep.subr.mxu0 0.0
    %151 = vmatpush1.msra.mxu0 %v137
    %152 = vmatprep.subr.mxu0 0.0
    %153 = vmatpush1.msra.mxu0 %v138
    %154 = vmatprep.subr.mxu0 0.0
    %155 = vmatpush1.msra.mxu0 %v139
    %156 = vmatprep.subr.mxu0 0.0
    %157 = vmatpush1.msra.mxu0 %v140
    %158 = vmatprep.subr.mxu0 0.0
    %159 = vmatpush1.msra.mxu0 %v141
    %160 = vmatprep.subr.mxu0 0.0
    %161 = vmatpush1.msra.mxu0 %v142
    %162 = vmatprep.subr.mxu0 0.0
    %163 = vmatpush1.msra.mxu0 0.0
    %164 = vmatprep.subr.mxu0 0.0
    %165 = vmatpush1.msra.mxu0 0.0
    %166 = vmatprep.subr.mxu0 0.0
    %167 = vmatpush1.msra.mxu0 0.0
    %168 = vmatprep.subr.mxu0 0.0
    %169 = vmatpush1.msra.mxu0 0.0
    %170 = vmatprep.subr.mxu0 0.0
    %171 = vmatpush1.msra.mxu0 0.0
    %172 = vmatprep.subr.mxu0 0.0
    %173 = vmatpush1.msra.mxu0 0.0
    %174 = vmatprep.subr.mxu0 0.0
    %175 = vmatpush1.msra.mxu0 0.0
    %176 = vmatprep.subr.mxu0 0.0
    %177 = vmatpush1.msra.mxu0 0.0
    %178 = vmatprep.subr.mxu0 0.0
    %179 = vmatpush1.msra.mxu0 0.0
    %180 = vmatprep.subr.mxu0 0.0
    %181 = vmatpush1.msra.mxu0 0.0
    %182 = vmatprep.subr.mxu0 0.0
    %183 = vmatpush1.msra.mxu0 0.0
    %184 = vmatprep.subr.mxu0 0.0
    %185 = vmatpush1.msra.mxu0 0.0
    %186 = vmatprep.subr.mxu0 0.0
    %187 = vmatpush1.msra.mxu0 0.0
    %188 = vmatprep.subr.mxu0 0.0
    %189 = vmatpush1.msra.mxu0 0.0
    %190 = vmatprep.subr.mxu0 0.0
    %191 = vmatpush1.msra.mxu0 0.0
    %192 = vmatprep.subr.mxu0 0.0
    %193 = vmatpush1.msra.mxu0 0.0
    %194 = vmatprep.subr.mxu0 0.0
    %195 = vmatpush1.msra.mxu0 0.0
    %196 = vmatprep.subr.mxu0 0.0
    %197 = vmatpush1.msra.mxu0 0.0
    %198 = vmatprep.subr.mxu0 0.0
    %199 = vmatpush1.msra.mxu0 0.0
    %200 = vmatprep.subr.mxu0 0.0
    %201 = vmatpush1.msra.mxu0 0.0
    %202 = vmatprep.subr.mxu0 0.0
    %203 = vmatpush1.msra.mxu0 0.0
    %204 = vmatprep.subr.mxu0 0.0
    %205 = vmatpush1.msra.mxu0 0.0
    %206 = vmatprep.subr.mxu0 0.0
    %207 = vmatpush1.msra.mxu0 0.0
    %208 = vmatprep.subr.mxu0 0.0
    %209 = vmatpush1.msra.mxu0 0.0
    %210 = vmatprep.mubr.f32.mxu0 0.0
    %211 = vmatmul.mubr.f32.gmra.mrb[0].mxu0 %v144
    %v212 = vpop.f32.mrb[0].mxu0
    %v213 = vadd.f32 0.0, %v212
    %v214 = vpop.f32.mrb[0].mxu0
    %215 = vdwg.mxu0
    %v216 = vmul.f32 %v213, 0.001953125
    %v217 = vlaneseq
    %v218 = vshrl.u32 %v217, 7
    %v219 = vsub.s32 0, %v218
    %v220 = vrot.slane %v216, %v219
    %v221 = vsub.f32 %v117, %v220
    %v222 = vsub.f32 %v118, %v220
    %v223 = vsub.f32 %v119, %v220
    %v224 = vsub.f32 %v120, %v220
    %v225 = vmul.f32 %v221, %v221
    %v226 = vmul.f32 %v222, %v222
    %v227 = vmul.f32 %v223, %v223
    %v228 = vmul.f32 %v224, %v224
    %v229 = vsel %vm121, %v225, 0.0
    %v230 = vsel %vm121, %v226, 0.0
    %v231 = vadd.f32 %v229, %v230
    %v232 = vsel %vm121, %v227, 0.0
    %v233 = vadd.f32 %v231, %v232
    %v234 = vsel %vm121, %v228, 0.0
    %v235 = vadd.f32 %v233, %v234
    %v236 = vrot.slane %v235, 4
    %v237 = vadd.f32 %v235, %v236
    %v238 = vrot.slane %v237, 2
    %v239 = vadd.f32 %v237, %v238
    %v240 = vrot.slane %v239, 1
    %v241 = vadd.f32 %v239, %v240
    %v243 = vsel %vm121, %v241, 0
    %245 = vmatprep.subr.mxu0 0.0
    %246 = vmatpush1.msra.mxu0 %v135
    %247 = vmatprep.subr.mxu0 0.0
    %248 = vmatpush1.msra.mxu0 %v136
    %249 = vmatprep.subr.mxu0 0.0
    %250 = vmatpush1.msra.mxu0 %v137
    %251 = vmatprep.subr.mxu0 0.0
    %252 = vmatpush1.msra.mxu0 %v138
    %253 = vmatprep.subr.mxu0 0.0
    %254 = vmatpush1.msra.mxu0 %v139
    %255 = vmatprep.subr.mxu0 0.0
    %256 = vmatpush1.msra.mxu0 %v140
    %257 = vmatprep.subr.mxu0 0.0
    %258 = vmatpush1.msra.mxu0 %v141
    %259 = vmatprep.subr.mxu0 0.0
    %260 = vmatpush1.msra.mxu0 %v142
    %261 = vmatprep.subr.mxu0 0.0
    %262 = vmatpush1.msra.mxu0 0.0
    %263 = vmatprep.subr.mxu0 0.0
    %264 = vmatpush1.msra.mxu0 0.0
    %265 = vmatprep.subr.mxu0 0.0
    %266 = vmatpush1.msra.mxu0 0.0
    %267 = vmatprep.subr.mxu0 0.0
    %268 = vmatpush1.msra.mxu0 0.0
    %269 = vmatprep.subr.mxu0 0.0
    %270 = vmatpush1.msra.mxu0 0.0
    %271 = vmatprep.subr.mxu0 0.0
    %272 = vmatpush1.msra.mxu0 0.0
    %273 = vmatprep.subr.mxu0 0.0
    %274 = vmatpush1.msra.mxu0 0.0
    %275 = vmatprep.subr.mxu0 0.0
    %276 = vmatpush1.msra.mxu0 0.0
    %277 = vmatprep.subr.mxu0 0.0
    %278 = vmatpush1.msra.mxu0 0.0
    %279 = vmatprep.subr.mxu0 0.0
    %280 = vmatpush1.msra.mxu0 0.0
    %281 = vmatprep.subr.mxu0 0.0
    %282 = vmatpush1.msra.mxu0 0.0
    %283 = vmatprep.subr.mxu0 0.0
    %284 = vmatpush1.msra.mxu0 0.0
    %285 = vmatprep.subr.mxu0 0.0
    %286 = vmatpush1.msra.mxu0 0.0
    %287 = vmatprep.subr.mxu0 0.0
    %288 = vmatpush1.msra.mxu0 0.0
    %289 = vmatprep.subr.mxu0 0.0
    %290 = vmatpush1.msra.mxu0 0.0
    %291 = vmatprep.subr.mxu0 0.0
    %292 = vmatpush1.msra.mxu0 0.0
    %293 = vmatprep.subr.mxu0 0.0
    %294 = vmatpush1.msra.mxu0 0.0
    %295 = vmatprep.subr.mxu0 0.0
    %296 = vmatpush1.msra.mxu0 0.0
    %297 = vmatprep.subr.mxu0 0.0
    %298 = vmatpush1.msra.mxu0 0.0
    %299 = vmatprep.subr.mxu0 0.0
    %300 = vmatpush1.msra.mxu0 0.0
    %301 = vmatprep.subr.mxu0 0.0
    %302 = vmatpush1.msra.mxu0 0.0
    %303 = vmatprep.subr.mxu0 0.0
    %304 = vmatpush1.msra.mxu0 0.0
    %305 = vmatprep.subr.mxu0 0.0
    %306 = vmatpush1.msra.mxu0 0.0
    %307 = vmatprep.subr.mxu0 0.0
    %308 = vmatpush1.msra.mxu0 0.0
    %309 = vmatprep.mubr.f32.mxu0 0.0
    %310 = vmatmul.mubr.f32.gmra.mrb[0].mxu0 %v243
    %v311 = vpop.f32.mrb[0].mxu0
    %v312 = vadd.f32 0.0, %v311
    %v313 = vpop.f32.mrb[0].mxu0
    %314 = vdwg.mxu0
    %v315 = vmul.f32 %v312, 0.001953125
    %v316 = vadd.f32 %v315, 1e-05
    %v317 = vrsqrt.pop %v316
    %v318 = vlaneseq
    %v319 = vshrl.u32 %v318, 7
    %v320 = vsub.s32 0, %v319
    %v321 = vrot.slane %v317, %v320
    %v322 = vmul.f32 %v221, %v321
    %v323 = vmul.f32 %v222, %v321
    %v324 = vmul.f32 %v223, %v321
    %v325 = vmul.f32 %v224, %v321
    %v326 = vld [vmem:[%s1] sm:$0x1]
    %v328 = vlaneseq
    %v329 = vshrl.u32 %v328, 7
    %v330 = vsub.s32 0, %v329
    %v331 = vrot.slane %v326, %v330
    %v333 = vmul.f32 %v322, %v331
    %v334 = vmul.f32 %v323, %v331
    %v335 = vmul.f32 %v324, %v331
    %v336 = vmul.f32 %v325, %v331
    %v337 = vld [vmem:[%s2] sm:$0x1]
    %v339 = vlaneseq
    %v340 = vshrl.u32 %v339, 7
    %v341 = vsub.s32 0, %v340
    %v342 = vrot.slane %v337, %v341
    %v344 = vadd.f32 %v333, %v342
    %v345 = vadd.f32 %v334, %v342
    %v346 = vadd.f32 %v335, %v342
    %v347 = vadd.f32 %v336, %v342
    %v348 = vmax.f32 %v344, 0.0
    %v349 = vmax.f32 %v345, 0.0
    %v350 = vmax.f32 %v346, 0.0
    %v351 = vmax.f32 %v347, 0.0
    %vm356 = vcmask 1040384
    %v357 = vrot.slane %v348, 7
    %v358 = vrot.slane %v349, 7
    %v359 = vsel %vm356, %v357, %v358
    %v360 = vrot.slane %v350, 7
    %v361 = vrot.slane %v351, 7
    %v362 = vsel %vm356, %v360, %v361
    %v367 = vsel %vm356, 0.0, %v357
    %v368 = vsel %vm356, 0.0, %v360
    %vm369 = vcmask 1046528
    %v370 = vrot.slane %v348, 1
    %v371 = vrot.slane %v349, 1
    %v372 = vsel %vm369, %v370, %v371
    %v373 = vrot.slane %v350, 1
    %v374 = vrot.slane %v351, 1
    %v375 = vsel %vm369, %v373, %v374
    %v380 = vsel %vm369, %v371, 0.0
    %v381 = vsel %vm369, %v374, 0.0
    %v382 = vpack.c.bf16 %v359, %v367
    %v383 = vpack.c.bf16 %v362, %v368
    %v384 = vld [vmem:[#allocation7] sm:$0xf]
    %v385 = vld [vmem:[#allocation7 + $0x4] sm:$0xf]
    %v386 = vld [vmem:[#allocation7 + $0x8] sm:$0xf]
    %v387 = vld [vmem:[#allocation7 + $0xc] sm:$0xf]
    %v388 = vld [vmem:[#allocation7 + $0x10] sm:$0xf]
    %v389 = vld [vmem:[#allocation7 + $0x14] sm:$0xf]
    %v390 = vld [vmem:[#allocation7 + $0x18] sm:$0xf]
    %v391 = vld [vmem:[#allocation7 + $0x1c] sm:$0xf]
    %v392 = vpack.c.bf16 %v349, %v348
    %v393 = vpack.c.bf16 %v351, %v350
    %s394 = scalar_lea.vmem [#allocation7], 32
    %v395 = vld [vmem:[%s394] sm:$0xf]
    %v396 = vld [vmem:[%s394 + $0x4] sm:$0xf]
    %v397 = vld [vmem:[%s394 + $0x8] sm:$0xf]
    %v398 = vld [vmem:[%s394 + $0xc] sm:$0xf]
    %v399 = vld [vmem:[%s394 + $0x10] sm:$0xf]
    %v400 = vld [vmem:[%s394 + $0x14] sm:$0xf]
    %v401 = vld [vmem:[%s394 + $0x18] sm:$0xf]
    %v402 = vld [vmem:[%s394 + $0x1c] sm:$0xf]
    %v411 = vunpack.c.l.b16 %v395
    %v412 = vunpack.c.l.b16 %v396
    %v413 = vunpack.c.l.b16 %v397
    %v414 = vunpack.c.l.b16 %v398
    %v415 = vunpack.c.l.b16 %v399
    %v416 = vunpack.c.l.b16 %v400
    %v417 = vunpack.c.l.b16 %v401
    %v418 = vunpack.c.l.b16 %v402
    %v419 = vpack.c.b16 %v412, %v411
    %v420 = vpack.c.b16 %v414, %v413
    %v421 = vpack.c.b16 %v416, %v415
    %v422 = vpack.c.b16 %v418, %v417
    %v428 = vsel %vm121, %v392, 0
    %v431 = vsel %vm121, %v393, 0
    %433 = vmatprep.subr.bf16.mxu0 0
    %434 = vmatpush1.bf16.msra.mxu0 %v419
    %435 = vmatprep.subr.bf16.mxu0 0
    %436 = vmatpush1.bf16.msra.mxu0 %v420
    %437 = vmatprep.subr.bf16.mxu0 0
    %438 = vmatpush1.bf16.msra.mxu0 %v421
    %439 = vmatprep.subr.bf16.mxu0 0
    %440 = vmatpush1.bf16.msra.mxu0 %v422
    %441 = vmatprep.subr.bf16.mxu0 0
    %442 = vmatpush1.bf16.msra.mxu0 0
    %443 = vmatprep.subr.bf16.mxu0 0
    %444 = vmatpush1.bf16.msra.mxu0 0
    %445 = vmatprep.subr.bf16.mxu0 0
    %446 = vmatpush1.bf16.msra.mxu0 0
    %447 = vmatprep.subr.bf16.mxu0 0
    %448 = vmatpush1.bf16.msra.mxu0 0
    %449 = vmatprep.subr.bf16.mxu0 0
    %450 = vmatpush1.bf16.msra.mxu0 0
    %451 = vmatprep.subr.bf16.mxu0 0
    %452 = vmatpush1.bf16.msra.mxu0 0
    %453 = vmatprep.subr.bf16.mxu0 0
    %454 = vmatpush1.bf16.msra.mxu0 0
    %455 = vmatprep.subr.bf16.mxu0 0
    %456 = vmatpush1.bf16.msra.mxu0 0
    %457 = vmatprep.subr.bf16.mxu0 0
    %458 = vmatpush1.bf16.msra.mxu0 0
    %459 = vmatprep.subr.bf16.mxu0 0
    %460 = vmatpush1.bf16.msra.mxu0 0
    %461 = vmatprep.subr.bf16.mxu0 0
    %462 = vmatpush1.bf16.msra.mxu0 0
    %463 = vmatprep.subr.bf16.mxu0 0
    %464 = vmatpush1.bf16.msra.mxu0 0
    %465 = vmatprep.mubr.bf16.mxu0 0
    %466 = vmatmul.mubr.bf16.gmra.mrb[0].mxu0 %v428
    %v467 = vpop.f32.mrb[0].mxu0
    %v468 = vadd.f32 0.0, %v467
    %v469 = vpop.f32.mrb[0].mxu0
    %v470 = vpop.f32.mrb[0].mxu0
    %v471 = vadd.f32 0.0, %v470
    %v472 = vpop.f32.mrb[0].mxu0
    %473 = vmatprep.mubr.bf16.mxu0 0
    %474 = vmatmul.mubr.bf16.gmra.mrb[0].mxu0 %v431
    %v475 = vpop.f32.mrb[0].mxu0
    %v476 = vadd.f32 0.0, %v475
    %v477 = vpop.f32.mrb[0].mxu0
    %v478 = vpop.f32.mrb[0].mxu0
    %v479 = vadd.f32 0.0, %v478
    %v480 = vpop.f32.mrb[0].mxu0
    %481 = vdwg.mxu0
    %v490 = vunpack.c.l.b16 %v384
    %v491 = vunpack.c.l.b16 %v385
    %v492 = vunpack.c.l.b16 %v386
    %v493 = vunpack.c.l.b16 %v387
    %v494 = vunpack.c.l.b16 %v388
    %v495 = vunpack.c.l.b16 %v389
    %v496 = vunpack.c.l.b16 %v390
    %v497 = vunpack.c.l.b16 %v391
    %v498 = vpack.c.b16 %v491, %v490
    %v499 = vpack.c.b16 %v493, %v492
    %v500 = vpack.c.b16 %v495, %v494
    %v501 = vpack.c.b16 %v497, %v496
    %v507 = vsel %vm121, %v382, 0
    %v510 = vsel %vm121, %v383, 0
    %512 = vmatprep.subr.bf16.mxu0 0
    %513 = vmatpush1.bf16.msra.mxu0 %v498
    %514 = vmatprep.subr.bf16.mxu0 0
    %515 = vmatpush1.bf16.msra.mxu0 %v499
    %516 = vmatprep.subr.bf16.mxu0 0
    %517 = vmatpush1.bf16.msra.mxu0 %v500
    %518 = vmatprep.subr.bf16.mxu0 0
    %519 = vmatpush1.bf16.msra.mxu0 %v501
    %520 = vmatprep.subr.bf16.mxu0 0
    %521 = vmatpush1.bf16.msra.mxu0 0
    %522 = vmatprep.subr.bf16.mxu0 0
    %523 = vmatpush1.bf16.msra.mxu0 0
    %524 = vmatprep.subr.bf16.mxu0 0
    %525 = vmatpush1.bf16.msra.mxu0 0
    %526 = vmatprep.subr.bf16.mxu0 0
    %527 = vmatpush1.bf16.msra.mxu0 0
    %528 = vmatprep.subr.bf16.mxu0 0
    %529 = vmatpush1.bf16.msra.mxu0 0
    %530 = vmatprep.subr.bf16.mxu0 0
    %531 = vmatpush1.bf16.msra.mxu0 0
    %532 = vmatprep.subr.bf16.mxu0 0
    %533 = vmatpush1.bf16.msra.mxu0 0
    %534 = vmatprep.subr.bf16.mxu0 0
    %535 = vmatpush1.bf16.msra.mxu0 0
    %536 = vmatprep.subr.bf16.mxu0 0
    %537 = vmatpush1.bf16.msra.mxu0 0
    %538 = vmatprep.subr.bf16.mxu0 0
    %539 = vmatpush1.bf16.msra.mxu0 0
    %540 = vmatprep.subr.bf16.mxu0 0
    %541 = vmatpush1.bf16.msra.mxu0 0
    %542 = vmatprep.subr.bf16.mxu0 0
    %543 = vmatpush1.bf16.msra.mxu0 0
    %544 = vmatprep.mubr.bf16.mxu0 0
    %545 = vmatmul.mubr.bf16.gmra.mrb[0].mxu0 %v507
    %v546 = vpop.f32.mrb[0].mxu0
    %v547 = vadd.f32 %v468, %v546
    %v548 = vpop.f32.mrb[0].mxu0
    %v549 = vpop.f32.mrb[0].mxu0
    %v550 = vadd.f32 %v471, %v549
    %v551 = vpop.f32.mrb[0].mxu0
    %552 = vmatprep.mubr.bf16.mxu0 0
    %553 = vmatmul.mubr.bf16.gmra.mrb[0].mxu0 %v510
    %v554 = vpop.f32.mrb[0].mxu0
    %v555 = vadd.f32 %v476, %v554
    %v556 = vpop.f32.mrb[0].mxu0
    %v557 = vpop.f32.mrb[0].mxu0
    %v558 = vadd.f32 %v479, %v557
    %v559 = vpop.f32.mrb[0].mxu0
    %560 = vdwg.mxu0
    %v561 = vpack.c.bf16 %v380, %v372
    %v562 = vpack.c.bf16 %v381, %v375
    %s563 = scalar_lea.vmem [#allocation7], 64
    %v564 = vld [vmem:[%s563] sm:$0xf]
    %v565 = vld [vmem:[%s563 + $0x4] sm:$0xf]
    %v566 = vld [vmem:[%s563 + $0x8] sm:$0xf]
    %v567 = vld [vmem:[%s563 + $0xc] sm:$0xf]
    %v568 = vld [vmem:[%s563 + $0x10] sm:$0xf]
    %v569 = vld [vmem:[%s563 + $0x14] sm:$0xf]
    %v570 = vld [vmem:[%s563 + $0x18] sm:$0xf]
    %v571 = vld [vmem:[%s563 + $0x1c] sm:$0xf]
    %v580 = vunpack.c.l.b16 %v564
    %v581 = vunpack.c.l.b16 %v565
    %v582 = vunpack.c.l.b16 %v566
    %v583 = vunpack.c.l.b16 %v567
    %v584 = vunpack.c.l.b16 %v568
    %v585 = vunpack.c.l.b16 %v569
    %v586 = vunpack.c.l.b16 %v570
    %v587 = vunpack.c.l.b16 %v571
    %v588 = vpack.c.b16 %v581, %v580
    %v589 = vpack.c.b16 %v583, %v582
    %v590 = vpack.c.b16 %v585, %v584
    %v591 = vpack.c.b16 %v587, %v586
    %v597 = vsel %vm121, %v561, 0
    %v600 = vsel %vm121, %v562, 0
    %602 = vmatprep.subr.bf16.mxu0 0
    %603 = vmatpush1.bf16.msra.mxu0 %v588
    %604 = vmatprep.subr.bf16.mxu0 0
    %605 = vmatpush1.bf16.msra.mxu0 %v589
    %606 = vmatprep.subr.bf16.mxu0 0
    %607 = vmatpush1.bf16.msra.mxu0 %v590
    %608 = vmatprep.subr.bf16.mxu0 0
    %609 = vmatpush1.bf16.msra.mxu0 %v591
    %610 = vmatprep.subr.bf16.mxu0 0
    %611 = vmatpush1.bf16.msra.mxu0 0
    %612 = vmatprep.subr.bf16.mxu0 0
    %613 = vmatpush1.bf16.msra.mxu0 0
    %614 = vmatprep.subr.bf16.mxu0 0
    %615 = vmatpush1.bf16.msra.mxu0 0
    %616 = vmatprep.subr.bf16.mxu0 0
    %617 = vmatpush1.bf16.msra.mxu0 0
    %618 = vmatprep.subr.bf16.mxu0 0
    %619 = vmatpush1.bf16.msra.mxu0 0
    %620 = vmatprep.subr.bf16.mxu0 0
    %621 = vmatpush1.bf16.msra.mxu0 0
    %622 = vmatprep.subr.bf16.mxu0 0
    %623 = vmatpush1.bf16.msra.mxu0 0
    %624 = vmatprep.subr.bf16.mxu0 0
    %625 = vmatpush1.bf16.msra.mxu0 0
    %626 = vmatprep.subr.bf16.mxu0 0
    %627 = vmatpush1.bf16.msra.mxu0 0
    %628 = vmatprep.subr.bf16.mxu0 0
    %629 = vmatpush1.bf16.msra.mxu0 0
    %630 = vmatprep.subr.bf16.mxu0 0
    %631 = vmatpush1.bf16.msra.mxu0 0
    %632 = vmatprep.subr.bf16.mxu0 0
    %633 = vmatpush1.bf16.msra.mxu0 0
    %634 = vmatprep.mubr.bf16.mxu0 0
    %635 = vmatmul.mubr.bf16.gmra.mrb[0].mxu0 %v597
    %v636 = vpop.f32.mrb[0].mxu0
    %v637 = vadd.f32 0.0, %v636
    %v638 = vpop.f32.mrb[0].mxu0
    %v639 = vpop.f32.mrb[0].mxu0
    %v640 = vadd.f32 0.0, %v639
    %v641 = vpop.f32.mrb[0].mxu0
    %642 = vmatprep.mubr.bf16.mxu0 0
    %643 = vmatmul.mubr.bf16.gmra.mrb[0].mxu0 %v600
    %v644 = vpop.f32.mrb[0].mxu0
    %v645 = vadd.f32 0.0, %v644
    %v646 = vpop.f32.mrb[0].mxu0
    %v647 = vpop.f32.mrb[0].mxu0
    %v648 = vadd.f32 0.0, %v647
    %v649 = vpop.f32.mrb[0].mxu0
    %650 = vdwg.mxu0
    %v651 = vadd.f32 %v547, %v637
    %v652 = vadd.f32 %v550, %v640
    %v653 = vadd.f32 %v555, %v645
    %v654 = vadd.f32 %v558, %v648
    %v655 = vld [vmem:[%s5] sm:$0x1]
    %v657 = vlaneseq
    %v658 = vshrl.u32 %v657, 7
    %v659 = vsub.s32 0, %v658
    %v660 = vrot.slane %v655, %v659
    %v662 = vadd.f32 %v651, %v660
    %v663 = vadd.f32 %v652, %v660
    %v664 = vadd.f32 %v653, %v660
    %v665 = vadd.f32 %v654, %v660
    %v666 = vadd.f32 %v662, %v663
    %v667 = vadd.f32 %v666, %v664
    %v668 = vadd.f32 %v667, %v665
    %v669 = vrot.slane %v668, 4
    %v670 = vadd.f32 %v668, %v669
    %v671 = vrot.slane %v670, 2
    %v672 = vadd.f32 %v670, %v671
    %v673 = vrot.slane %v672, 1
    %v674 = vadd.f32 %v672, %v673
    %v675 = vld [vmem:[#allocation8] sm:$0xff]
    %v676 = vld [vmem:[#allocation8 + $0x8] sm:$0xff]
    %v677 = vld [vmem:[#allocation8 + $0x10] sm:$0xff]
    %v678 = vld [vmem:[#allocation8 + $0x18] sm:$0xff]
    %v679 = vld [vmem:[#allocation8 + $0x20] sm:$0xff]
    %v680 = vld [vmem:[#allocation8 + $0x28] sm:$0xff]
    %v681 = vld [vmem:[#allocation8 + $0x30] sm:$0xff]
    %v682 = vld [vmem:[#allocation8 + $0x38] sm:$0xff]
    %v683 = vld [vmem:[#allocation8 + $0x40] sm:$0xff]
    %v684 = vld [vmem:[#allocation8 + $0x48] sm:$0xff]
    %v685 = vld [vmem:[#allocation8 + $0x50] sm:$0xff]
    %v686 = vld [vmem:[#allocation8 + $0x58] sm:$0xff]
    %v687 = vld [vmem:[#allocation8 + $0x60] sm:$0xff]
    %v688 = vld [vmem:[#allocation8 + $0x68] sm:$0xff]
    %v689 = vld [vmem:[#allocation8 + $0x70] sm:$0xff]
    %v690 = vld [vmem:[#allocation8 + $0x78] sm:$0xff]
    %691 = vmatprep.subr.mxu0 0.0
    %692 = vmatpush1.msra.mxu0 %v675
    %693 = vmatprep.subr.mxu0 0.0
    %694 = vmatpush1.msra.mxu0 %v676
    %695 = vmatprep.subr.mxu0 0.0
    %696 = vmatpush1.msra.mxu0 %v677
    %697 = vmatprep.subr.mxu0 0.0
    %698 = vmatpush1.msra.mxu0 %v678
    %699 = vmatprep.subr.mxu0 0.0
    %700 = vmatpush1.msra.mxu0 %v679
    %701 = vmatprep.subr.mxu0 0.0
    %702 = vmatpush1.msra.mxu0 %v680
    %703 = vmatprep.subr.mxu0 0.0
    %704 = vmatpush1.msra.mxu0 %v681
    %705 = vmatprep.subr.mxu0 0.0
    %706 = vmatpush1.msra.mxu0 %v682
    %707 = vmatprep.subr.mxu0 0.0
    %708 = vmatpush1.msra.mxu0 %v683
    %709 = vmatprep.subr.mxu0 0.0
    %710 = vmatpush1.msra.mxu0 %v684
    %711 = vmatprep.subr.mxu0 0.0
    %712 = vmatpush1.msra.mxu0 %v685
    %713 = vmatprep.subr.mxu0 0.0
    %714 = vmatpush1.msra.mxu0 %v686
    %715 = vmatprep.subr.mxu0 0.0
    %716 = vmatpush1.msra.mxu0 %v687
    %717 = vmatprep.subr.mxu0 0.0
    %718 = vmatpush1.msra.mxu0 %v688
    %719 = vmatprep.subr.mxu0 0.0
    %720 = vmatpush1.msra.mxu0 %v689
    %721 = vmatprep.subr.mxu0 0.0
    %722 = vmatpush1.msra.mxu0 %v690
    %723 = vmatprep.subr.mxu0 0.0
    %724 = vmatpush1.msra.mxu0 0.0
    %725 = vmatprep.subr.mxu0 0.0
    %726 = vmatpush1.msra.mxu0 0.0
    %727 = vmatprep.subr.mxu0 0.0
    %728 = vmatpush1.msra.mxu0 0.0
    %729 = vmatprep.subr.mxu0 0.0
    %730 = vmatpush1.msra.mxu0 0.0
    %731 = vmatprep.subr.mxu0 0.0
    %732 = vmatpush1.msra.mxu0 0.0
    %733 = vmatprep.subr.mxu0 0.0
    %734 = vmatpush1.msra.mxu0 0.0
    %735 = vmatprep.subr.mxu0 0.0
    %736 = vmatpush1.msra.mxu0 0.0
    %737 = vmatprep.subr.mxu0 0.0
    %738 = vmatpush1.msra.mxu0 0.0
    %739 = vmatprep.subr.mxu0 0.0
    %740 = vmatpush1.msra.mxu0 0.0
    %741 = vmatprep.subr.mxu0 0.0
    %742 = vmatpush1.msra.mxu0 0.0
    %743 = vmatprep.subr.mxu0 0.0
    %744 = vmatpush1.msra.mxu0 0.0
    %745 = vmatprep.subr.mxu0 0.0
    %746 = vmatpush1.msra.mxu0 0.0
    %747 = vmatprep.subr.mxu0 0.0
    %748 = vmatpush1.msra.mxu0 0.0
    %749 = vmatprep.subr.mxu0 0.0
    %750 = vmatpush1.msra.mxu0 0.0
    %751 = vmatprep.subr.mxu0 0.0
    %752 = vmatpush1.msra.mxu0 0.0
    %753 = vmatprep.subr.mxu0 0.0
    %754 = vmatpush1.msra.mxu0 0.0
    %755 = vmatprep.mubr.f32.mxu0 0.0
    %756 = vmatmul.mubr.f32.gmra.mrb[0].mxu0 %v674
    %v757 = vpop.f32.mrb[0].mxu0
    %v758 = vadd.f32 0.0, %v757
    %v759 = vpop.f32.mrb[0].mxu0
    %760 = vdwg.mxu0
    %v761 = vmul.f32 %v758, 0.001953125
    %v762 = vlaneseq
    %v763 = vshrl.u32 %v762, 7
    %v764 = vsub.s32 0, %v763
    %v765 = vrot.slane %v761, %v764
    %v766 = vsub.f32 %v662, %v765
    %v767 = vsub.f32 %v663, %v765
    %v768 = vsub.f32 %v664, %v765
    %v769 = vsub.f32 %v665, %v765
    %v770 = vmul.f32 %v766, %v766
    %v771 = vmul.f32 %v767, %v767
    %v772 = vmul.f32 %v768, %v768
    %v773 = vmul.f32 %v769, %v769
    %v774 = vadd.f32 %v770, %v771
    %v775 = vadd.f32 %v774, %v772
    %v776 = vadd.f32 %v775, %v773
    %v777 = vrot.slane %v776, 4
    %v778 = vadd.f32 %v776, %v777
    %v779 = vrot.slane %v778, 2
    %v780 = vadd.f32 %v778, %v779
    %v781 = vrot.slane %v780, 1
    %v782 = vadd.f32 %v780, %v781
    %783 = vmatprep.subr.mxu0 0.0
    %784 = vmatpush1.msra.mxu0 %v675
    %785 = vmatprep.subr.mxu0 0.0
    %786 = vmatpush1.msra.mxu0 %v676
    %787 = vmatprep.subr.mxu0 0.0
    %788 = vmatpush1.msra.mxu0 %v677
    %789 = vmatprep.subr.mxu0 0.0
    %790 = vmatpush1.msra.mxu0 %v678
    %791 = vmatprep.subr.mxu0 0.0
    %792 = vmatpush1.msra.mxu0 %v679
    %793 = vmatprep.subr.mxu0 0.0
    %794 = vmatpush1.msra.mxu0 %v680
    %795 = vmatprep.subr.mxu0 0.0
    %796 = vmatpush1.msra.mxu0 %v681
    %797 = vmatprep.subr.mxu0 0.0
    %798 = vmatpush1.msra.mxu0 %v682
    %799 = vmatprep.subr.mxu0 0.0
    %800 = vmatpush1.msra.mxu0 %v683
    %801 = vmatprep.subr.mxu0 0.0
    %802 = vmatpush1.msra.mxu0 %v684
    %803 = vmatprep.subr.mxu0 0.0
    %804 = vmatpush1.msra.mxu0 %v685
    %805 = vmatprep.subr.mxu0 0.0
    %806 = vmatpush1.msra.mxu0 %v686
    %807 = vmatprep.subr.mxu0 0.0
    %808 = vmatpush1.msra.mxu0 %v687
    %809 = vmatprep.subr.mxu0 0.0
    %810 = vmatpush1.msra.mxu0 %v688
    %811 = vmatprep.subr.mxu0 0.0
    %812 = vmatpush1.msra.mxu0 %v689
    %813 = vmatprep.subr.mxu0 0.0
    %814 = vmatpush1.msra.mxu0 %v690
    %815 = vmatprep.subr.mxu0 0.0
    %816 = vmatpush1.msra.mxu0 0.0
    %817 = vmatprep.subr.mxu0 0.0
    %818 = vmatpush1.msra.mxu0 0.0
    %819 = vmatprep.subr.mxu0 0.0
    %820 = vmatpush1.msra.mxu0 0.0
    %821 = vmatprep.subr.mxu0 0.0
    %822 = vmatpush1.msra.mxu0 0.0
    %823 = vmatprep.subr.mxu0 0.0
    %824 = vmatpush1.msra.mxu0 0.0
    %825 = vmatprep.subr.mxu0 0.0
    %826 = vmatpush1.msra.mxu0 0.0
    %827 = vmatprep.subr.mxu0 0.0
    %828 = vmatpush1.msra.mxu0 0.0
    %829 = vmatprep.subr.mxu0 0.0
    %830 = vmatpush1.msra.mxu0 0.0
    %831 = vmatprep.subr.mxu0 0.0
    %832 = vmatpush1.msra.mxu0 0.0
    %833 = vmatprep.subr.mxu0 0.0
    %834 = vmatpush1.msra.mxu0 0.0
    %835 = vmatprep.subr.mxu0 0.0
    %836 = vmatpush1.msra.mxu0 0.0
    %837 = vmatprep.subr.mxu0 0.0
    %838 = vmatpush1.msra.mxu0 0.0
    %839 = vmatprep.subr.mxu0 0.0
    %840 = vmatpush1.msra.mxu0 0.0
    %841 = vmatprep.subr.mxu0 0.0
    %842 = vmatpush1.msra.mxu0 0.0
    %843 = vmatprep.subr.mxu0 0.0
    %844 = vmatpush1.msra.mxu0 0.0
    %845 = vmatprep.subr.mxu0 0.0
    %846 = vmatpush1.msra.mxu0 0.0
    %847 = vmatprep.mubr.f32.mxu0 0.0
    %848 = vmatmul.mubr.f32.gmra.mrb[0].mxu0 %v782
    %v849 = vpop.f32.mrb[0].mxu0
    %v850 = vadd.f32 0.0, %v849
    %v851 = vpop.f32.mrb[0].mxu0
    %852 = vdwg.mxu0
    %v853 = vmul.f32 %v850, 0.001953125
    %v854 = vadd.f32 %v853, 1e-05
    %v855 = vrsqrt.pop %v854
    %v856 = vlaneseq
    %v857 = vshrl.u32 %v856, 7
    %v858 = vsub.s32 0, %v857
    %v859 = vrot.slane %v855, %v858
    %v860 = vmul.f32 %v766, %v859
    %v861 = vmul.f32 %v767, %v859
    %v862 = vmul.f32 %v768, %v859
    %v863 = vmul.f32 %v769, %v859
    %v864 = vld [vmem:[%s6] sm:$0x1]
    %v866 = vlaneseq
    %v867 = vshrl.u32 %v866, 7
    %v868 = vsub.s32 0, %v867
    %v869 = vrot.slane %v864, %v868
    %v871 = vmul.f32 %v860, %v869
    %v872 = vmul.f32 %v861, %v869
    %v873 = vmul.f32 %v862, %v869
    %v874 = vmul.f32 %v863, %v869
    %v875 = vld [vmem:[%s7] sm:$0x1]
    %v877 = vlaneseq
    %v878 = vshrl.u32 %v877, 7
    %v879 = vsub.s32 0, %v878
    %v880 = vrot.slane %v875, %v879
    %v882 = vadd.f32 %v871, %v880
    %v883 = vadd.f32 %v872, %v880
    %v884 = vadd.f32 %v873, %v880
    %v885 = vadd.f32 %v874, %v880
    %v886 = vmax.f32 %v882, 0.0
    %v887 = vmax.f32 %v883, 0.0
    %v888 = vmax.f32 %v884, 0.0
    %v889 = vmax.f32 %v885, 0.0
    %v894 = vrot.slane %v886, 7
    %v895 = vrot.slane %v887, 7
    %v896 = vsel %vm356, %v894, %v895
    %v897 = vrot.slane %v888, 7
    %v898 = vrot.slane %v889, 7
    %v899 = vsel %vm356, %v897, %v898
    %v904 = vsel %vm356, 0.0, %v894
    %v905 = vsel %vm356, 0.0, %v897
    %v906 = vrot.slane %v886, 1
    %v907 = vrot.slane %v887, 1
    %v908 = vsel %vm369, %v906, %v907
    %v909 = vrot.slane %v888, 1
    %v910 = vrot.slane %v889, 1
    %v911 = vsel %vm369, %v909, %v910
    %v916 = vsel %vm369, %v907, 0.0
    %v917 = vsel %vm369, %v910, 0.0
    %v918 = vpack.c.bf16 %v896, %v904
    %v919 = vpack.c.bf16 %v899, %v905
    %v920 = vld [vmem:[#allocation10] sm:$0xf]
    %v921 = vld [vmem:[#allocation10 + $0x4] sm:$0xf]
    %v922 = vld [vmem:[#allocation10 + $0x8] sm:$0xf]
    %v923 = vld [vmem:[#allocation10 + $0xc] sm:$0xf]
    %v924 = vld [vmem:[#allocation10 + $0x10] sm:$0xf]
    %v925 = vld [vmem:[#allocation10 + $0x14] sm:$0xf]
    %v926 = vld [vmem:[#allocation10 + $0x18] sm:$0xf]
    %v927 = vld [vmem:[#allocation10 + $0x1c] sm:$0xf]
    %v928 = vld [vmem:[#allocation10 + $0x20] sm:$0xf]
    %v929 = vld [vmem:[#allocation10 + $0x24] sm:$0xf]
    %v930 = vld [vmem:[#allocation10 + $0x28] sm:$0xf]
    %v931 = vld [vmem:[#allocation10 + $0x2c] sm:$0xf]
    %v932 = vld [vmem:[#allocation10 + $0x30] sm:$0xf]
    %v933 = vld [vmem:[#allocation10 + $0x34] sm:$0xf]
    %v934 = vld [vmem:[#allocation10 + $0x38] sm:$0xf]
    %v935 = vld [vmem:[#allocation10 + $0x3c] sm:$0xf]
    %v936 = vpack.c.bf16 %v887, %v886
    %v937 = vpack.c.bf16 %v889, %v888
    %s938 = scalar_lea.vmem [#allocation10], 64
    %v939 = vld [vmem:[%s938] sm:$0xf]
    %v940 = vld [vmem:[%s938 + $0x4] sm:$0xf]
    %v941 = vld [vmem:[%s938 + $0x8] sm:$0xf]
    %v942 = vld [vmem:[%s938 + $0xc] sm:$0xf]
    %v943 = vld [vmem:[%s938 + $0x10] sm:$0xf]
    %v944 = vld [vmem:[%s938 + $0x14] sm:$0xf]
    %v945 = vld [vmem:[%s938 + $0x18] sm:$0xf]
    %v946 = vld [vmem:[%s938 + $0x1c] sm:$0xf]
    %v947 = vld [vmem:[%s938 + $0x20] sm:$0xf]
    %v948 = vld [vmem:[%s938 + $0x24] sm:$0xf]
    %v949 = vld [vmem:[%s938 + $0x28] sm:$0xf]
    %v950 = vld [vmem:[%s938 + $0x2c] sm:$0xf]
    %v951 = vld [vmem:[%s938 + $0x30] sm:$0xf]
    %v952 = vld [vmem:[%s938 + $0x34] sm:$0xf]
    %v953 = vld [vmem:[%s938 + $0x38] sm:$0xf]
    %v954 = vld [vmem:[%s938 + $0x3c] sm:$0xf]
    %v971 = vunpack.c.l.b16 %v939
    %v972 = vunpack.c.l.b16 %v940
    %v973 = vunpack.c.l.b16 %v941
    %v974 = vunpack.c.l.b16 %v942
    %v975 = vunpack.c.l.b16 %v943
    %v976 = vunpack.c.l.b16 %v944
    %v977 = vunpack.c.l.b16 %v945
    %v978 = vunpack.c.l.b16 %v946
    %v979 = vunpack.c.l.b16 %v947
    %v980 = vunpack.c.l.b16 %v948
    %v981 = vunpack.c.l.b16 %v949
    %v982 = vunpack.c.l.b16 %v950
    %v983 = vunpack.c.l.b16 %v951
    %v984 = vunpack.c.l.b16 %v952
    %v985 = vunpack.c.l.b16 %v953
    %v986 = vunpack.c.l.b16 %v954
    %v987 = vpack.c.b16 %v972, %v971
    %v988 = vpack.c.b16 %v974, %v973
    %v989 = vpack.c.b16 %v976, %v975
    %v990 = vpack.c.b16 %v978, %v977
    %v991 = vpack.c.b16 %v980, %v979
    %v992 = vpack.c.b16 %v982, %v981
    %v993 = vpack.c.b16 %v984, %v983
    %v994 = vpack.c.b16 %v986, %v985
    %1003 = vmatprep.subr.bf16.mxu0 0
    %1004 = vmatpush1.bf16.msra.mxu0 %v987
    %1005 = vmatprep.subr.bf16.mxu0 0
    %1006 = vmatpush1.bf16.msra.mxu0 %v988
    %1007 = vmatprep.subr.bf16.mxu0 0
    %1008 = vmatpush1.bf16.msra.mxu0 %v989
    %1009 = vmatprep.subr.bf16.mxu0 0
    %1010 = vmatpush1.bf16.msra.mxu0 %v990
    %1011 = vmatprep.subr.bf16.mxu0 0
    %1012 = vmatpush1.bf16.msra.mxu0 %v991
    %1013 = vmatprep.subr.bf16.mxu0 0
    %1014 = vmatpush1.bf16.msra.mxu0 %v992
    %1015 = vmatprep.subr.bf16.mxu0 0
    %1016 = vmatpush1.bf16.msra.mxu0 %v993
    %1017 = vmatprep.subr.bf16.mxu0 0
    %1018 = vmatpush1.bf16.msra.mxu0 %v994
    %1019 = vmatprep.subr.bf16.mxu0 0
    %1020 = vmatpush1.bf16.msra.mxu0 0
    %1021 = vmatprep.subr.bf16.mxu0 0
    %1022 = vmatpush1.bf16.msra.mxu0 0
    %1023 = vmatprep.subr.bf16.mxu0 0
    %1024 = vmatpush1.bf16.msra.mxu0 0
    %1025 = vmatprep.subr.bf16.mxu0 0
    %1026 = vmatpush1.bf16.msra.mxu0 0
    %1027 = vmatprep.subr.bf16.mxu0 0
    %1028 = vmatpush1.bf16.msra.mxu0 0
    %1029 = vmatprep.subr.bf16.mxu0 0
    %1030 = vmatpush1.bf16.msra.mxu0 0
    %1031 = vmatprep.subr.bf16.mxu0 0
    %1032 = vmatpush1.bf16.msra.mxu0 0
    %1033 = vmatprep.subr.bf16.mxu0 0
    %1034 = vmatpush1.bf16.msra.mxu0 0
    %1035 = vmatprep.mubr.bf16.mxu0 0
    %1036 = vmatmul.mubr.bf16.gmra.mrb[0].mxu0 %v936
    %v1037 = vpop.f32.mrb[0].mxu0
    %v1038 = vadd.f32 0.0, %v1037
    %v1039 = vpop.f32.mrb[0].mxu0
    %v1040 = vpop.f32.mrb[0].mxu0
    %v1041 = vadd.f32 0.0, %v1040
    %v1042 = vpop.f32.mrb[0].mxu0
    %1043 = vmatprep.mubr.bf16.mxu0 0
    %1044 = vmatmul.mubr.bf16.gmra.mrb[0].mxu0 %v937
    %v1045 = vpop.f32.mrb[0].mxu0
    %v1046 = vadd.f32 0.0, %v1045
    %v1047 = vpop.f32.mrb[0].mxu0
    %v1048 = vpop.f32.mrb[0].mxu0
    %v1049 = vadd.f32 0.0, %v1048
    %v1050 = vpop.f32.mrb[0].mxu0
    %1051 = vdwg.mxu0
    %v1068 = vunpack.c.l.b16 %v920
    %v1069 = vunpack.c.l.b16 %v921
    %v1070 = vunpack.c.l.b16 %v922
    %v1071 = vunpack.c.l.b16 %v923
    %v1072 = vunpack.c.l.b16 %v924
    %v1073 = vunpack.c.l.b16 %v925
    %v1074 = vunpack.c.l.b16 %v926
    %v1075 = vunpack.c.l.b16 %v927
    %v1076 = vunpack.c.l.b16 %v928
    %v1077 = vunpack.c.l.b16 %v929
    %v1078 = vunpack.c.l.b16 %v930
    %v1079 = vunpack.c.l.b16 %v931
    %v1080 = vunpack.c.l.b16 %v932
    %v1081 = vunpack.c.l.b16 %v933
    %v1082 = vunpack.c.l.b16 %v934
    %v1083 = vunpack.c.l.b16 %v935
    %v1084 = vpack.c.b16 %v1069, %v1068
    %v1085 = vpack.c.b16 %v1071, %v1070
    %v1086 = vpack.c.b16 %v1073, %v1072
    %v1087 = vpack.c.b16 %v1075, %v1074
    %v1088 = vpack.c.b16 %v1077, %v1076
    %v1089 = vpack.c.b16 %v1079, %v1078
    %v1090 = vpack.c.b16 %v1081, %v1080
    %v1091 = vpack.c.b16 %v1083, %v1082
    %1100 = vmatprep.subr.bf16.mxu0 0
    %1101 = vmatpush1.bf16.msra.mxu0 %v1084
    %1102 = vmatprep.subr.bf16.mxu0 0
    %1103 = vmatpush1.bf16.msra.mxu0 %v1085
    %1104 = vmatprep.subr.bf16.mxu0 0
    %1105 = vmatpush1.bf16.msra.mxu0 %v1086
    %1106 = vmatprep.subr.bf16.mxu0 0
    %1107 = vmatpush1.bf16.msra.mxu0 %v1087
    %1108 = vmatprep.subr.bf16.mxu0 0
    %1109 = vmatpush1.bf16.msra.mxu0 %v1088
    %1110 = vmatprep.subr.bf16.mxu0 0
    %1111 = vmatpush1.bf16.msra.mxu0 %v1089
    %1112 = vmatprep.subr.bf16.mxu0 0
    %1113 = vmatpush1.bf16.msra.mxu0 %v1090
    %1114 = vmatprep.subr.bf16.mxu0 0
    %1115 = vmatpush1.bf16.msra.mxu0 %v1091
    %1116 = vmatprep.subr.bf16.mxu0 0
    %1117 = vmatpush1.bf16.msra.mxu0 0
    %1118 = vmatprep.subr.bf16.mxu0 0
    %1119 = vmatpush1.bf16.msra.mxu0 0
    %1120 = vmatprep.subr.bf16.mxu0 0
    %1121 = vmatpush1.bf16.msra.mxu0 0
    %1122 = vmatprep.subr.bf16.mxu0 0
    %1123 = vmatpush1.bf16.msra.mxu0 0
    %1124 = vmatprep.subr.bf16.mxu0 0
    %1125 = vmatpush1.bf16.msra.mxu0 0
    %1126 = vmatprep.subr.bf16.mxu0 0
    %1127 = vmatpush1.bf16.msra.mxu0 0
    %1128 = vmatprep.subr.bf16.mxu0 0
    %1129 = vmatpush1.bf16.msra.mxu0 0
    %1130 = vmatprep.subr.bf16.mxu0 0
    %1131 = vmatpush1.bf16.msra.mxu0 0
    %1132 = vmatprep.mubr.bf16.mxu0 0
    %1133 = vmatmul.mubr.bf16.gmra.mrb[0].mxu0 %v918
    %v1134 = vpop.f32.mrb[0].mxu0
    %v1135 = vadd.f32 %v1038, %v1134
    %v1136 = vpop.f32.mrb[0].mxu0
    %v1137 = vpop.f32.mrb[0].mxu0
    %v1138 = vadd.f32 %v1041, %v1137
    %v1139 = vpop.f32.mrb[0].mxu0
    %1140 = vmatprep.mubr.bf16.mxu0 0
    %1141 = vmatmul.mubr.bf16.gmra.mrb[0].mxu0 %v919
    %v1142 = vpop.f32.mrb[0].mxu0
    %v1143 = vadd.f32 %v1046, %v1142
    %v1144 = vpop.f32.mrb[0].mxu0
    %v1145 = vpop.f32.mrb[0].mxu0
    %v1146 = vadd.f32 %v1049, %v1145
    %v1147 = vpop.f32.mrb[0].mxu0
    %1148 = vdwg.mxu0
    %v1149 = vpack.c.bf16 %v916, %v908
    %v1150 = vpack.c.bf16 %v917, %v911
    %s1151 = scalar_lea.vmem [#allocation10], 128
    %v1152 = vld [vmem:[%s1151] sm:$0xf]
    %v1153 = vld [vmem:[%s1151 + $0x4] sm:$0xf]
    %v1154 = vld [vmem:[%s1151 + $0x8] sm:$0xf]
    %v1155 = vld [vmem:[%s1151 + $0xc] sm:$0xf]
    %v1156 = vld [vmem:[%s1151 + $0x10] sm:$0xf]
    %v1157 = vld [vmem:[%s1151 + $0x14] sm:$0xf]
    %v1158 = vld [vmem:[%s1151 + $0x18] sm:$0xf]
    %v1159 = vld [vmem:[%s1151 + $0x1c] sm:$0xf]
    %v1160 = vld [vmem:[%s1151 + $0x20] sm:$0xf]
    %v1161 = vld [vmem:[%s1151 + $0x24] sm:$0xf]
    %v1162 = vld [vmem:[%s1151 + $0x28] sm:$0xf]
    %v1163 = vld [vmem:[%s1151 + $0x2c] sm:$0xf]
    %v1164 = vld [vmem:[%s1151 + $0x30] sm:$0xf]
    %v1165 = vld [vmem:[%s1151 + $0x34] sm:$0xf]
    %v1166 = vld [vmem:[%s1151 + $0x38] sm:$0xf]
    %v1167 = vld [vmem:[%s1151 + $0x3c] sm:$0xf]
    %v1184 = vunpack.c.l.b16 %v1152
    %v1185 = vunpack.c.l.b16 %v1153
    %v1186 = vunpack.c.l.b16 %v1154
    %v1187 = vunpack.c.l.b16 %v1155
    %v1188 = vunpack.c.l.b16 %v1156
    %v1189 = vunpack.c.l.b16 %v1157
    %v1190 = vunpack.c.l.b16 %v1158
    %v1191 = vunpack.c.l.b16 %v1159
    %v1192 = vunpack.c.l.b16 %v1160
    %v1193 = vunpack.c.l.b16 %v1161
    %v1194 = vunpack.c.l.b16 %v1162
    %v1195 = vunpack.c.l.b16 %v1163
    %v1196 = vunpack.c.l.b16 %v1164
    %v1197 = vunpack.c.l.b16 %v1165
    %v1198 = vunpack.c.l.b16 %v1166
    %v1199 = vunpack.c.l.b16 %v1167
    %v1200 = vpack.c.b16 %v1185, %v1184
    %v1201 = vpack.c.b16 %v1187, %v1186
    %v1202 = vpack.c.b16 %v1189, %v1188
    %v1203 = vpack.c.b16 %v1191, %v1190
    %v1204 = vpack.c.b16 %v1193, %v1192
    %v1205 = vpack.c.b16 %v1195, %v1194
    %v1206 = vpack.c.b16 %v1197, %v1196
    %v1207 = vpack.c.b16 %v1199, %v1198
    %1216 = vmatprep.subr.bf16.mxu0 0
    %1217 = vmatpush1.bf16.msra.mxu0 %v1200
    %1218 = vmatprep.subr.bf16.mxu0 0
    %1219 = vmatpush1.bf16.msra.mxu0 %v1201
    %1220 = vmatprep.subr.bf16.mxu0 0
    %1221 = vmatpush1.bf16.msra.mxu0 %v1202
    %1222 = vmatprep.subr.bf16.mxu0 0
    %1223 = vmatpush1.bf16.msra.mxu0 %v1203
    %1224 = vmatprep.subr.bf16.mxu0 0
    %1225 = vmatpush1.bf16.msra.mxu0 %v1204
    %1226 = vmatprep.subr.bf16.mxu0 0
    %1227 = vmatpush1.bf16.msra.mxu0 %v1205
    %1228 = vmatprep.subr.bf16.mxu0 0
    %1229 = vmatpush1.bf16.msra.mxu0 %v1206
    %1230 = vmatprep.subr.bf16.mxu0 0
    %1231 = vmatpush1.bf16.msra.mxu0 %v1207
    %1232 = vmatprep.subr.bf16.mxu0 0
    %1233 = vmatpush1.bf16.msra.mxu0 0
    %1234 = vmatprep.subr.bf16.mxu0 0
    %1235 = vmatpush1.bf16.msra.mxu0 0
    %1236 = vmatprep.subr.bf16.mxu0 0
    %1237 = vmatpush1.bf16.msra.mxu0 0
    %1238 = vmatprep.subr.bf16.mxu0 0
    %1239 = vmatpush1.bf16.msra.mxu0 0
    %1240 = vmatprep.subr.bf16.mxu0 0
    %1241 = vmatpush1.bf16.msra.mxu0 0
    %1242 = vmatprep.subr.bf16.mxu0 0
    %1243 = vmatpush1.bf16.msra.mxu0 0
    %1244 = vmatprep.subr.bf16.mxu0 0
    %1245 = vmatpush1.bf16.msra.mxu0 0
    %1246 = vmatprep.subr.bf16.mxu0 0
    %1247 = vmatpush1.bf16.msra.mxu0 0
    %1248 = vmatprep.mubr.bf16.mxu0 0
    %1249 = vmatmul.mubr.bf16.gmra.mrb[0].mxu0 %v1149
    %v1250 = vpop.f32.mrb[0].mxu0
    %v1251 = vadd.f32 0.0, %v1250
    %v1252 = vpop.f32.mrb[0].mxu0
    %v1253 = vpop.f32.mrb[0].mxu0
    %v1254 = vadd.f32 0.0, %v1253
    %v1255 = vpop.f32.mrb[0].mxu0
    %1256 = vmatprep.mubr.bf16.mxu0 0
    %1257 = vmatmul.mubr.bf16.gmra.mrb[0].mxu0 %v1150
    %v1258 = vpop.f32.mrb[0].mxu0
    %v1259 = vadd.f32 0.0, %v1258
    %v1260 = vpop.f32.mrb[0].mxu0
    %v1261 = vpop.f32.mrb[0].mxu0
    %v1262 = vadd.f32 0.0, %v1261
    %v1263 = vpop.f32.mrb[0].mxu0
    %1264 = vdwg.mxu0
    %v1265 = vadd.f32 %v1135, %v1251
    %v1266 = vadd.f32 %v1138, %v1254
    %v1267 = vadd.f32 %v1143, %v1259
    %v1268 = vadd.f32 %v1146, %v1262
    %v1269 = vld [vmem:[%s10] sm:$0x1]
    %v1271 = vlaneseq
    %v1272 = vshrl.u32 %v1271, 7
    %v1273 = vsub.s32 0, %v1272
    %v1274 = vrot.slane %v1269, %v1273
    %v1276 = vadd.f32 %v1265, %v1274
    %v1277 = vadd.f32 %v1266, %v1274
    %v1278 = vadd.f32 %v1267, %v1274
    %v1279 = vadd.f32 %v1268, %v1274
    %v1280 = vpack.c.bf16 %v118, %v117
    %v1281 = vpack.c.bf16 %v120, %v119
    %v1282 = vld [vmem:[%s11] sm:$0xf]
    %v1283 = vld [vmem:[%s11 + $0x4] sm:$0xf]
    %v1284 = vld [vmem:[%s11 + $0x8] sm:$0xf]
    %v1285 = vld [vmem:[%s11 + $0xc] sm:$0xf]
    %v1286 = vld [vmem:[%s11 + $0x10] sm:$0xf]
    %v1287 = vld [vmem:[%s11 + $0x14] sm:$0xf]
    %v1288 = vld [vmem:[%s11 + $0x18] sm:$0xf]
    %v1289 = vld [vmem:[%s11 + $0x1c] sm:$0xf]
    %v1298 = vunpack.c.l.b16 %v1282
    %v1299 = vunpack.c.l.b16 %v1283
    %v1300 = vunpack.c.l.b16 %v1284
    %v1301 = vunpack.c.l.b16 %v1285
    %v1302 = vunpack.c.l.b16 %v1286
    %v1303 = vunpack.c.l.b16 %v1287
    %v1304 = vunpack.c.l.b16 %v1288
    %v1305 = vunpack.c.l.b16 %v1289
    %v1306 = vpack.c.b16 %v1299, %v1298
    %v1307 = vpack.c.b16 %v1301, %v1300
    %v1308 = vpack.c.b16 %v1303, %v1302
    %v1309 = vpack.c.b16 %v1305, %v1304
    %v1315 = vsel %vm121, %v1280, 0
    %v1318 = vsel %vm121, %v1281, 0
    %1320 = vmatprep.subr.bf16.mxu0 0
    %1321 = vmatpush1.bf16.msra.mxu0 %v1306
    %1322 = vmatprep.subr.bf16.mxu0 0
    %1323 = vmatpush1.bf16.msra.mxu0 %v1307
    %1324 = vmatprep.subr.bf16.mxu0 0
    %1325 = vmatpush1.bf16.msra.mxu0 %v1308
    %1326 = vmatprep.subr.bf16.mxu0 0
    %1327 = vmatpush1.bf16.msra.mxu0 %v1309
    %1328 = vmatprep.subr.bf16.mxu0 0
    %1329 = vmatpush1.bf16.msra.mxu0 0
    %1330 = vmatprep.subr.bf16.mxu0 0
    %1331 = vmatpush1.bf16.msra.mxu0 0
    %1332 = vmatprep.subr.bf16.mxu0 0
    %1333 = vmatpush1.bf16.msra.mxu0 0
    %1334 = vmatprep.subr.bf16.mxu0 0
    %1335 = vmatpush1.bf16.msra.mxu0 0
    %1336 = vmatprep.subr.bf16.mxu0 0
    %1337 = vmatpush1.bf16.msra.mxu0 0
    %1338 = vmatprep.subr.bf16.mxu0 0
    %1339 = vmatpush1.bf16.msra.mxu0 0
    %1340 = vmatprep.subr.bf16.mxu0 0
    %1341 = vmatpush1.bf16.msra.mxu0 0
    %1342 = vmatprep.subr.bf16.mxu0 0
    %1343 = vmatpush1.bf16.msra.mxu0 0
    %1344 = vmatprep.subr.bf16.mxu0 0
    %1345 = vmatpush1.bf16.msra.mxu0 0
    %1346 = vmatprep.subr.bf16.mxu0 0
    %1347 = vmatpush1.bf16.msra.mxu0 0
    %1348 = vmatprep.subr.bf16.mxu0 0
    %1349 = vmatpush1.bf16.msra.mxu0 0
    %1350 = vmatprep.subr.bf16.mxu0 0
    %1351 = vmatpush1.bf16.msra.mxu0 0
    %1352 = vmatprep.mubr.bf16.mxu0 0
    %1353 = vmatmul.mubr.bf16.gmra.mrb[0].mxu0 %v1315
    %v1354 = vpop.f32.mrb[0].mxu0
    %v1355 = vadd.f32 0.0, %v1354
    %v1356 = vpop.f32.mrb[0].mxu0
    %v1357 = vpop.f32.mrb[0].mxu0
    %v1358 = vadd.f32 0.0, %v1357
    %v1359 = vpop.f32.mrb[0].mxu0
    %1360 = vmatprep.mubr.bf16.mxu0 0
    %1361 = vmatmul.mubr.bf16.gmra.mrb[0].mxu0 %v1318
    %v1362 = vpop.f32.mrb[0].mxu0
    %v1363 = vadd.f32 0.0, %v1362
    %v1364 = vpop.f32.mrb[0].mxu0
    %v1365 = vpop.f32.mrb[0].mxu0
    %v1366 = vadd.f32 0.0, %v1365
    %v1367 = vpop.f32.mrb[0].mxu0
    %1368 = vdwg.mxu0
    %v1369 = vadd.f32 %v1355, %v1358
    %v1370 = vadd.f32 %v1369, %v1363
    %v1371 = vadd.f32 %v1370, %v1366
    %v1372 = vrot.slane %v1371, 4
    %v1373 = vadd.f32 %v1371, %v1372
    %v1374 = vrot.slane %v1373, 2
    %v1375 = vadd.f32 %v1373, %v1374
    %v1376 = vrot.slane %v1375, 1
    %v1377 = vadd.f32 %v1375, %v1376
    %1378 = vmatprep.subr.mxu0 0.0
    %1379 = vmatpush1.msra.mxu0 %v675
    %1380 = vmatprep.subr.mxu0 0.0
    %1381 = vmatpush1.msra.mxu0 %v676
    %1382 = vmatprep.subr.mxu0 0.0
    %1383 = vmatpush1.msra.mxu0 %v677
    %1384 = vmatprep.subr.mxu0 0.0
    %1385 = vmatpush1.msra.mxu0 %v678
    %1386 = vmatprep.subr.mxu0 0.0
    %1387 = vmatpush1.msra.mxu0 %v679
    %1388 = vmatprep.subr.mxu0 0.0
    %1389 = vmatpush1.msra.mxu0 %v680
    %1390 = vmatprep.subr.mxu0 0.0
    %1391 = vmatpush1.msra.mxu0 %v681
    %1392 = vmatprep.subr.mxu0 0.0
    %1393 = vmatpush1.msra.mxu0 %v682
    %1394 = vmatprep.subr.mxu0 0.0
    %1395 = vmatpush1.msra.mxu0 %v683
    %1396 = vmatprep.subr.mxu0 0.0
    %1397 = vmatpush1.msra.mxu0 %v684
    %1398 = vmatprep.subr.mxu0 0.0
    %1399 = vmatpush1.msra.mxu0 %v685
    %1400 = vmatprep.subr.mxu0 0.0
    %1401 = vmatpush1.msra.mxu0 %v686
    %1402 = vmatprep.subr.mxu0 0.0
    %1403 = vmatpush1.msra.mxu0 %v687
    %1404 = vmatprep.subr.mxu0 0.0
    %1405 = vmatpush1.msra.mxu0 %v688
    %1406 = vmatprep.subr.mxu0 0.0
    %1407 = vmatpush1.msra.mxu0 %v689
    %1408 = vmatprep.subr.mxu0 0.0
    %1409 = vmatpush1.msra.mxu0 %v690
    %1410 = vmatprep.subr.mxu0 0.0
    %1411 = vmatpush1.msra.mxu0 0.0
    %1412 = vmatprep.subr.mxu0 0.0
    %1413 = vmatpush1.msra.mxu0 0.0
    %1414 = vmatprep.subr.mxu0 0.0
    %1415 = vmatpush1.msra.mxu0 0.0
    %1416 = vmatprep.subr.mxu0 0.0
    %1417 = vmatpush1.msra.mxu0 0.0
    %1418 = vmatprep.subr.mxu0 0.0
    %1419 = vmatpush1.msra.mxu0 0.0
    %1420 = vmatprep.subr.mxu0 0.0
    %1421 = vmatpush1.msra.mxu0 0.0
    %1422 = vmatprep.subr.mxu0 0.0
    %1423 = vmatpush1.msra.mxu0 0.0
    %1424 = vmatprep.subr.mxu0 0.0
    %1425 = vmatpush1.msra.mxu0 0.0
    %1426 = vmatprep.subr.mxu0 0.0
    %1427 = vmatpush1.msra.mxu0 0.0
    %1428 = vmatprep.subr.mxu0 0.0
    %1429 = vmatpush1.msra.mxu0 0.0
    %1430 = vmatprep.subr.mxu0 0.0
    %1431 = vmatpush1.msra.mxu0 0.0
    %1432 = vmatprep.subr.mxu0 0.0
    %1433 = vmatpush1.msra.mxu0 0.0
    %1434 = vmatprep.subr.mxu0 0.0
    %1435 = vmatpush1.msra.mxu0 0.0
    %1436 = vmatprep.subr.mxu0 0.0
    %1437 = vmatpush1.msra.mxu0 0.0
    %1438 = vmatprep.subr.mxu0 0.0
    %1439 = vmatpush1.msra.mxu0 0.0
    %1440 = vmatprep.subr.mxu0 0.0
    %1441 = vmatpush1.msra.mxu0 0.0
    %1442 = vmatprep.mubr.f32.mxu0 0.0
    %1443 = vmatmul.mubr.f32.gmra.mrb[0].mxu0 %v1377
    %v1444 = vpop.f32.mrb[0].mxu0
    %v1445 = vadd.f32 0.0, %v1444
    %v1446 = vpop.f32.mrb[0].mxu0
    %1447 = vdwg.mxu0
    %v1448 = vmul.f32 %v1445, 0.001953125
    %v1449 = vlaneseq
    %v1450 = vshrl.u32 %v1449, 7
    %v1451 = vsub.s32 0, %v1450
    %v1452 = vrot.slane %v1448, %v1451
    %v1453 = vsub.f32 %v1355, %v1452
    %v1454 = vsub.f32 %v1358, %v1452
    %v1455 = vsub.f32 %v1363, %v1452
    %v1456 = vsub.f32 %v1366, %v1452
    %v1457 = vmul.f32 %v1453, %v1453
    %v1458 = vmul.f32 %v1454, %v1454
    %v1459 = vmul.f32 %v1455, %v1455
    %v1460 = vmul.f32 %v1456, %v1456
    %v1461 = vadd.f32 %v1457, %v1458
    %v1462 = vadd.f32 %v1461, %v1459
    %v1463 = vadd.f32 %v1462, %v1460
    %v1464 = vrot.slane %v1463, 4
    %v1465 = vadd.f32 %v1463, %v1464
    %v1466 = vrot.slane %v1465, 2
    %v1467 = vadd.f32 %v1465, %v1466
    %v1468 = vrot.slane %v1467, 1
    %v1469 = vadd.f32 %v1467, %v1468
    %1470 = vmatprep.subr.mxu0 0.0
    %1471 = vmatpush1.msra.mxu0 %v675
    %1472 = vmatprep.subr.mxu0 0.0
    %1473 = vmatpush1.msra.mxu0 %v676
    %1474 = vmatprep.subr.mxu0 0.0
    %1475 = vmatpush1.msra.mxu0 %v677
    %1476 = vmatprep.subr.mxu0 0.0
    %1477 = vmatpush1.msra.mxu0 %v678
    %1478 = vmatprep.subr.mxu0 0.0
    %1479 = vmatpush1.msra.mxu0 %v679
    %1480 = vmatprep.subr.mxu0 0.0
    %1481 = vmatpush1.msra.mxu0 %v680
    %1482 = vmatprep.subr.mxu0 0.0
    %1483 = vmatpush1.msra.mxu0 %v681
    %1484 = vmatprep.subr.mxu0 0.0
    %1485 = vmatpush1.msra.mxu0 %v682
    %1486 = vmatprep.subr.mxu0 0.0
    %1487 = vmatpush1.msra.mxu0 %v683
    %1488 = vmatprep.subr.mxu0 0.0
    %1489 = vmatpush1.msra.mxu0 %v684
    %1490 = vmatprep.subr.mxu0 0.0
    %1491 = vmatpush1.msra.mxu0 %v685
    %1492 = vmatprep.subr.mxu0 0.0
    %1493 = vmatpush1.msra.mxu0 %v686
    %1494 = vmatprep.subr.mxu0 0.0
    %1495 = vmatpush1.msra.mxu0 %v687
    %1496 = vmatprep.subr.mxu0 0.0
    %1497 = vmatpush1.msra.mxu0 %v688
    %1498 = vmatprep.subr.mxu0 0.0
    %1499 = vmatpush1.msra.mxu0 %v689
    %1500 = vmatprep.subr.mxu0 0.0
    %1501 = vmatpush1.msra.mxu0 %v690
    %1502 = vmatprep.subr.mxu0 0.0
    %1503 = vmatpush1.msra.mxu0 0.0
    %1504 = vmatprep.subr.mxu0 0.0
    %1505 = vmatpush1.msra.mxu0 0.0
    %1506 = vmatprep.subr.mxu0 0.0
    %1507 = vmatpush1.msra.mxu0 0.0
    %1508 = vmatprep.subr.mxu0 0.0
    %1509 = vmatpush1.msra.mxu0 0.0
    %1510 = vmatprep.subr.mxu0 0.0
    %1511 = vmatpush1.msra.mxu0 0.0
    %1512 = vmatprep.subr.mxu0 0.0
    %1513 = vmatpush1.msra.mxu0 0.0
    %1514 = vmatprep.subr.mxu0 0.0
    %1515 = vmatpush1.msra.mxu0 0.0
    %1516 = vmatprep.subr.mxu0 0.0
    %1517 = vmatpush1.msra.mxu0 0.0
    %1518 = vmatprep.subr.mxu0 0.0
    %1519 = vmatpush1.msra.mxu0 0.0
    %1520 = vmatprep.subr.mxu0 0.0
    %1521 = vmatpush1.msra.mxu0 0.0
    %1522 = vmatprep.subr.mxu0 0.0
    %1523 = vmatpush1.msra.mxu0 0.0
    %1524 = vmatprep.subr.mxu0 0.0
    %1525 = vmatpush1.msra.mxu0 0.0
    %1526 = vmatprep.subr.mxu0 0.0
    %1527 = vmatpush1.msra.mxu0 0.0
    %1528 = vmatprep.subr.mxu0 0.0
    %1529 = vmatpush1.msra.mxu0 0.0
    %1530 = vmatprep.subr.mxu0 0.0
    %1531 = vmatpush1.msra.mxu0 0.0
    %1532 = vmatprep.subr.mxu0 0.0
    %1533 = vmatpush1.msra.mxu0 0.0
    %1534 = vmatprep.mubr.f32.mxu0 0.0
    %1535 = vmatmul.mubr.f32.gmra.mrb[0].mxu0 %v1469
    %v1536 = vpop.f32.mrb[0].mxu0
    %v1537 = vadd.f32 0.0, %v1536
    %v1538 = vpop.f32.mrb[0].mxu0
    %1539 = vdwg.mxu0
    %v1540 = vmul.f32 %v1537, 0.001953125
    %v1541 = vadd.f32 %v1540, 1e-05
    %v1542 = vrsqrt.pop %v1541
    %v1543 = vlaneseq
    %v1544 = vshrl.u32 %v1543, 7
    %v1545 = vsub.s32 0, %v1544
    %v1546 = vrot.slane %v1542, %v1545
    %v1547 = vmul.f32 %v1453, %v1546
    %v1548 = vmul.f32 %v1454, %v1546
    %v1549 = vmul.f32 %v1455, %v1546
    %v1550 = vmul.f32 %v1456, %v1546
    %v1551 = vld [vmem:[%s12] sm:$0x1]
    %v1553 = vlaneseq
    %v1554 = vshrl.u32 %v1553, 7
    %v1555 = vsub.s32 0, %v1554
    %v1556 = vrot.slane %v1551, %v1555
    %v1558 = vmul.f32 %v1547, %v1556
    %v1559 = vmul.f32 %v1548, %v1556
    %v1560 = vmul.f32 %v1549, %v1556
    %v1561 = vmul.f32 %v1550, %v1556
    %v1562 = vld [vmem:[%s13] sm:$0x1]
    %v1564 = vlaneseq
    %v1565 = vshrl.u32 %v1564, 7
    %v1566 = vsub.s32 0, %v1565
    %v1567 = vrot.slane %v1562, %v1566
    %v1569 = vadd.f32 %v1558, %v1567
    %v1570 = vadd.f32 %v1559, %v1567
    %v1571 = vadd.f32 %v1560, %v1567
    %v1572 = vadd.f32 %v1561, %v1567
    %v1573 = vadd.f32 %v1276, %v1569
    %v1574 = vadd.f32 %v1277, %v1570
    %v1575 = vadd.f32 %v1278, %v1571
    %v1576 = vadd.f32 %v1279, %v1572
    %v1577 = vmax.f32 %v1573, 0.0
    %v1578 = vmax.f32 %v1574, 0.0
    %v1579 = vmax.f32 %v1575, 0.0
    %v1580 = vmax.f32 %v1576, 0.0
    %1581 = vst [vmem:[#allocation11] sm:$0xff] %v1577
    %1582 = vst [vmem:[#allocation11 + $0x8] sm:$0xff] %v1578
    %1583 = vst [vmem:[#allocation11 + $0x10] sm:$0xff] %v1579
    %1584 = vst [vmem:[#allocation11 + $0x18] sm:$0xff] %v1580
    // Predicated region
    $region78: #{tpu_custom_call.1} parent=1 // pred_check
      _
    $region79: #{tpu_custom_call.1} parent=1 // pred_check_branch
      %1586 = sbr.rel (0) target = $region81
    $region80: #{tpu_custom_call.1} parent=1 // pred_region
      %s1588 = ssub.s32 512, 512
      %1589 = vsyncadd [#allocation4], %s1588
      %s1590 = sshll.u32 [#allocation11], 4
      %s1591 = int_to_ptr.vmem [resolvable:$true] %s1590
      %1596 = dma.vmem_to_hbm [thread:$0]  %s1591, 512, %s14, [#allocation4], 128, 128, 8
    $region81: #{tpu_custom_call.1} parent=1 // pred_fallthru
      _
    // Predicated region
    $region82: #{tpu_custom_call.1} parent=1 // pred_check
      _
    $region83: #{tpu_custom_call.1} parent=1 // pred_check_branch
      %1598 = sbr.rel (0) target = $region85
    $region84: #{tpu_custom_call.1} parent=1 // pred_region
      %1599 = dma.done [#allocation4], 512
    $region85: #{tpu_custom_call.1} parent=1 // pred_fallthru
      _
    %1600 = vsyncpa [#allocation3], 1
    %1601 = vsyncpa [#allocation6], 1
    %1602 = vsyncpa [#allocation9], 1
    %1603 = vsyncpa [#allocation4], 1

</llo_original>
